<compile_context>
chip_gen: v7x
topology: tpu7x:2x2x1
jax: 0.10.0
libtpu: 0.0.40
codegen_flags: <defaults>
</compile_context>

<pallas_src>
import functools

import jax
import jax.numpy as jnp
from jax.experimental import pallas as pl
from jax.experimental.pallas import tpu as pltpu


def _patch_producer_kernel(
    x_ref,
    w1_ref, b1_ref,
    w2_ref, b2_ref,
    w3_ref, b3_ref,
    w4_ref, b4_ref,
    o_ref,
):
    # bf16 operands -> MXU with f32 accumulation; f32 bias/ReLU epilogue (VPU).
    h = jnp.dot(x_ref[...], w1_ref[...], preferred_element_type=jnp.float32)
    h = jnp.maximum(h + b1_ref[...], 0.0)

    h = jnp.dot(h.astype(jnp.bfloat16), w2_ref[...],
                preferred_element_type=jnp.float32)
    h = jnp.maximum(h + b2_ref[...], 0.0)

    h = jnp.dot(h.astype(jnp.bfloat16), w3_ref[...],
                preferred_element_type=jnp.float32)
    h = jnp.maximum(h + b3_ref[...], 0.0)

    h = jnp.dot(h.astype(jnp.bfloat16), w4_ref[...],
                preferred_element_type=jnp.float32)
    o_ref[...] = h + b4_ref[...]


def _fold_bn(gamma, beta, running_mean, running_var, eps=1e-5):
    """Eval-mode BatchNorm1d as per-feature scale/shift vectors."""
    scale = gamma / jnp.sqrt(running_var + eps)
    shift = beta - running_mean * scale
    return scale, shift


def _round_up(n, m):
    return ((n + m - 1) // m) * m


@functools.partial(jax.jit, static_argnames=("channels", "patch_len", "batch_tile"))
def patch_producer_forward(x, params, *, channels=3, patch_len=16, batch_tile=256):
    B, in_dim = x.shape
    out_dim = channels * patch_len * patch_len

    w1, b1 = params["w1"], params["b1"]
    w2, b2 = params["w2"], params["b2"]
    w3, b3 = params["w3"], params["b3"]
    w4, b4 = params["w4"], params["b4"]
    s1, t1 = _fold_bn(*params["bn1"])
    s2, t2 = _fold_bn(*params["bn2"])
    s3, t3 = _fold_bn(*params["bn3"])
    s4, t4 = _fold_bn(*params["bn4"])

    # Fold BN affines into adjacent Linear layers (tiny host-side tensors,
    # computed in f32 before the bf16 cast):
    #   relu(fc1) -> bn1 -> fc2        : bn1 scale into rows of W2, shift into b2
    #   relu(fc2) -> bn2 -> fc3        : likewise for W3/b3
    #   relu(fc3) -> bn3 -> fc4 -> bn4 : bn3 into rows of W4, bn4 into cols of W4
    w1f, b1f = w1, b1
    w2f = s1[:, None] * w2
    b2f = t1 @ w2 + b2
    w3f = s2[:, None] * w3
    b3f = t2 @ w3 + b3
    w4f = s3[:, None] * w4 * s4[None, :]
    b4f = s4 * (t3 @ w4 + b4) + t4

    # Lane-align the input feature dim (e.g. 21 -> 128) with zeros.
    k1 = _round_up(in_dim, 128)
    w1f = jnp.pad(w1f, ((0, k1 - in_dim), (0, 0)))

    # Batch tiling: pad (never assert) the batch to a tile multiple; never use
    # a tile coarser than the (8-aligned) batch itself.
    eff_tile = min(batch_tile, _round_up(B, 8))
    b_pad = _round_up(B, eff_tile)
    n_tiles = pl.cdiv(b_pad, eff_tile)

    x_p = jnp.pad(x, ((0, b_pad - B), (0, k1 - in_dim))).astype(jnp.bfloat16)

    # bf16 matmul operands; biases stay f32 (applied in the f32 epilogue).
    w1b, w2b, w3b, w4b = (w.astype(jnp.bfloat16) for w in (w1f, w2f, w3f, w4f))
    b1r = b1f[None, :].astype(jnp.float32)
    b2r = b2f[None, :].astype(jnp.float32)
    b3r = b3f[None, :].astype(jnp.float32)
    b4r = b4f[None, :].astype(jnp.float32)

    def const_spec(shape):
        nd = len(shape)
        return pl.BlockSpec(shape, lambda i, _nd=nd: (0,) * _nd)

    in_specs = [
        pl.BlockSpec((eff_tile, k1), lambda i: (i, 0)),          # x, tiled over batch
        const_spec(w1b.shape), const_spec(b1r.shape),
        const_spec(w2b.shape), const_spec(b2r.shape),
        const_spec(w3b.shape), const_spec(b3r.shape),
        const_spec(w4b.shape), const_spec(b4r.shape),
    ]
    out_spec = pl.BlockSpec((eff_tile, out_dim), lambda i: (i, 0))

    flat = pl.pallas_call(
        _patch_producer_kernel,
        out_shape=jax.ShapeDtypeStruct((b_pad, out_dim), jnp.float32),
        grid=(n_tiles,),
        in_specs=in_specs,
        out_specs=out_spec,
        compiler_params=pltpu.CompilerParams(
            dimension_semantics=("parallel",),
        ),
    )(
        x_p,
        w1b, b1r,
        w2b, b2r,
        w3b, b3r,
        w4b, b4r,
    )

    flat = flat[:B]
    # torch.reshape is row-major -> NCHW (B, C, P, P)
    return flat.reshape(B, channels, patch_len, patch_len)


def init_params(key, input_dim=21, patch_len=16, channels=3):
    """Deterministic synthetic init.  Linear weights stored as (in, out) so the
    kernel computes x @ W (equivalent to torch's x @ weight.T)."""
    dims = [input_dim, 128, 256, 512, patch_len * patch_len * channels]
    params = {}
    keys = jax.random.split(key, 24)
    ki = 0
    for layer in range(4):
        fan_in, fan_out = dims[layer], dims[layer + 1]
        bound = 1.0 / (fan_in ** 0.5)
        params[f"w{layer + 1}"] = jax.random.uniform(
            keys[ki], (fan_in, fan_out), jnp.float32, -bound, bound); ki += 1
        params[f"b{layer + 1}"] = jax.random.uniform(
            keys[ki], (fan_out,), jnp.float32, -bound, bound); ki += 1
        # BatchNorm1d params: gamma, beta, running_mean, running_var
        gamma = 1.0 + 0.1 * jax.random.normal(keys[ki], (fan_out,), jnp.float32); ki += 1
        beta = 0.1 * jax.random.normal(keys[ki], (fan_out,), jnp.float32); ki += 1
        running_mean = 0.1 * jax.random.normal(keys[ki], (fan_out,), jnp.float32); ki += 1
        running_var = 1.0 + 0.2 * jax.random.uniform(keys[ki], (fan_out,), jnp.float32); ki += 1
        params[f"bn{layer + 1}"] = (gamma, beta, running_mean, running_var)
    return params


def reference_forward(x, params, channels=3, patch_len=16):
    """Pure-JAX f32 reference (same eval-mode semantics) for a sanity check."""
    h = x
    for layer in range(1, 5):
        h = h @ params[f"w{layer}"] + params[f"b{layer}"]
        if layer < 4:
            h = jnp.maximum(h, 0.0)
        gamma, beta, mu, var = params[f"bn{layer}"]
        h = gamma * (h - mu) / jnp.sqrt(var + 1e-5) + beta
    return h.reshape(x.shape[0], channels, patch_len, patch_len)


if __name__ == "__main__":
    key = jax.random.PRNGKey(0)
    k_x, k_p = jax.random.split(key)

    # Small shapes consistent with the module: (B, input_dim=21) -> (B, 3, 16, 16).
    # B=32 is not a multiple of 128, exercising the sub-tile / lane-padding path.
    B, INPUT_DIM, PATCH_LEN, CHANNELS = 32, 21, 16, 3
    x = jax.random.normal(k_x, (B, INPUT_DIM), jnp.float32)
    params = init_params(k_p, INPUT_DIM, PATCH_LEN, CHANNELS)

    out = patch_producer_forward(
        x, params, channels=CHANNELS, patch_len=PATCH_LEN, batch_tile=256
    )
    out = jax.block_until_ready(out)

    assert out.shape == (B, CHANNELS, PATCH_LEN, PATCH_LEN), out.shape

    ref = reference_forward(x, params, CHANNELS, PATCH_LEN)
    # bf16 matmul operands (f32 accumulation) across 4 layers -> loosened
    # tolerance vs the pure-f32 reference.
    max_err = float(jnp.max(jnp.abs(out - ref)))
    assert jnp.allclose(out, ref, atol=1e-1, rtol=5e-2), max_err

    print("KERNEL_OK")
</pallas_src>

<mosaic_0001>
module attributes {stable_mosaic.version = 11 : i64} {
  func.func @_patch_producer_kernel(%arg0: i32, %arg1: memref<32x128xbf16, #tpu.memory_space<vmem>>, %arg2: memref<128x128xbf16, #tpu.memory_space<vmem>>, %arg3: memref<1x128xf32, #tpu.memory_space<vmem>>, %arg4: memref<128x256xbf16, #tpu.memory_space<vmem>>, %arg5: memref<1x256xf32, #tpu.memory_space<vmem>>, %arg6: memref<256x512xbf16, #tpu.memory_space<vmem>>, %arg7: memref<1x512xf32, #tpu.memory_space<vmem>>, %arg8: memref<512x768xbf16, #tpu.memory_space<vmem>>, %arg9: memref<1x768xf32, #tpu.memory_space<vmem>>, %arg10: memref<32x768xf32, #tpu.memory_space<vmem>>) attributes {dimension_semantics = [#tpu.dimension_semantics<parallel>], iteration_bounds = array<i64: 1>, scalar_prefetch = 0 : i64, scratch_operands = 0 : i64, tpu.core_type = #tpu.core_type<tc>, window_params = [{transform_indices = @transform_0, window_bounds = array<i64: 32, 128>}, {pipeline_mode = #tpu.pipeline_mode<synchronous>, transform_indices = @transform_1, window_bounds = array<i64: 128, 128>}, {pipeline_mode = #tpu.pipeline_mode<synchronous>, transform_indices = @transform_2, window_bounds = array<i64: 1, 128>}, {pipeline_mode = #tpu.pipeline_mode<synchronous>, transform_indices = @transform_3, window_bounds = array<i64: 128, 256>}, {pipeline_mode = #tpu.pipeline_mode<synchronous>, transform_indices = @transform_4, window_bounds = array<i64: 1, 256>}, {pipeline_mode = #tpu.pipeline_mode<synchronous>, transform_indices = @transform_5, window_bounds = array<i64: 256, 512>}, {pipeline_mode = #tpu.pipeline_mode<synchronous>, transform_indices = @transform_6, window_bounds = array<i64: 1, 512>}, {pipeline_mode = #tpu.pipeline_mode<synchronous>, transform_indices = @transform_7, window_bounds = array<i64: 512, 768>}, {pipeline_mode = #tpu.pipeline_mode<synchronous>, transform_indices = @transform_8, window_bounds = array<i64: 1, 768>}, {transform_indices = @transform_9, window_bounds = array<i64: 32, 768>}]} {
    %c0 = arith.constant 0 : index
    %c0_0 = arith.constant 0 : index
    %0 = vector.load %arg1[%c0, %c0_0] : memref<32x128xbf16, #tpu.memory_space<vmem>>, vector<32x128xbf16>
    %c0_1 = arith.constant 0 : index
    %c0_2 = arith.constant 0 : index
    %1 = vector.load %arg2[%c0_1, %c0_2] : memref<128x128xbf16, #tpu.memory_space<vmem>>, vector<128x128xbf16>
    %cst = arith.constant dense<0.000000e+00> : vector<32x128xf32>
    %2 = tpu.matmul %0, %1, %cst {dimension_numbers = #tpu.dot_dimension_numbers<[1], [0], [0], [1], [0, 0, 1, 1], [], []>} : vector<32x128xbf16>, vector<128x128xbf16>, vector<32x128xf32> -> vector<32x128xf32>
    %c0_3 = arith.constant 0 : index
    %c0_4 = arith.constant 0 : index
    %3 = vector.load %arg3[%c0_3, %c0_4] : memref<1x128xf32, #tpu.memory_space<vmem>>, vector<1x128xf32>
    %4 = vector.broadcast %3 : vector<1x128xf32> to vector<32x128xf32>
    %5 = arith.addf %2, %4 : vector<32x128xf32>
    %cst_5 = arith.constant 0.000000e+00 : f32
    %6 = vector.broadcast %cst_5 : f32 to vector<32x128xf32>
    %7 = arith.maximumf %5, %6 : vector<32x128xf32>
    %8 = arith.truncf %7 : vector<32x128xf32> to vector<32x128xbf16>
    %c0_6 = arith.constant 0 : index
    %c0_7 = arith.constant 0 : index
    %9 = vector.load %arg4[%c0_6, %c0_7] : memref<128x256xbf16, #tpu.memory_space<vmem>>, vector<128x256xbf16>
    %cst_8 = arith.constant dense<0.000000e+00> : vector<32x256xf32>
    %10 = tpu.matmul %8, %9, %cst_8 {dimension_numbers = #tpu.dot_dimension_numbers<[1], [0], [0], [1], [0, 0, 1, 1], [], []>} : vector<32x128xbf16>, vector<128x256xbf16>, vector<32x256xf32> -> vector<32x256xf32>
    %c0_9 = arith.constant 0 : index
    %c0_10 = arith.constant 0 : index
    %11 = vector.load %arg5[%c0_9, %c0_10] : memref<1x256xf32, #tpu.memory_space<vmem>>, vector<1x256xf32>
    %12 = vector.broadcast %11 : vector<1x256xf32> to vector<32x256xf32>
    %13 = arith.addf %10, %12 : vector<32x256xf32>
    %cst_11 = arith.constant 0.000000e+00 : f32
    %14 = vector.broadcast %cst_11 : f32 to vector<32x256xf32>
    %15 = arith.maximumf %13, %14 : vector<32x256xf32>
    %16 = arith.truncf %15 : vector<32x256xf32> to vector<32x256xbf16>
    %c0_12 = arith.constant 0 : index
    %c0_13 = arith.constant 0 : index
    %17 = vector.load %arg6[%c0_12, %c0_13] : memref<256x512xbf16, #tpu.memory_space<vmem>>, vector<256x512xbf16>
    %cst_14 = arith.constant dense<0.000000e+00> : vector<32x512xf32>
    %18 = tpu.matmul %16, %17, %cst_14 {dimension_numbers = #tpu.dot_dimension_numbers<[1], [0], [0], [1], [0, 0, 1, 1], [], []>} : vector<32x256xbf16>, vector<256x512xbf16>, vector<32x512xf32> -> vector<32x512xf32>
    %c0_15 = arith.constant 0 : index
    %c0_16 = arith.constant 0 : index
    %19 = vector.load %arg7[%c0_15, %c0_16] : memref<1x512xf32, #tpu.memory_space<vmem>>, vector<1x512xf32>
    %20 = vector.broadcast %19 : vector<1x512xf32> to vector<32x512xf32>
    %21 = arith.addf %18, %20 : vector<32x512xf32>
    %cst_17 = arith.constant 0.000000e+00 : f32
    %22 = vector.broadcast %cst_17 : f32 to vector<32x512xf32>
    %23 = arith.maximumf %21, %22 : vector<32x512xf32>
    %24 = arith.truncf %23 : vector<32x512xf32> to vector<32x512xbf16>
    %c0_18 = arith.constant 0 : index
    %c0_19 = arith.constant 0 : index
    %25 = vector.load %arg8[%c0_18, %c0_19] : memref<512x768xbf16, #tpu.memory_space<vmem>>, vector<512x768xbf16>
    %cst_20 = arith.constant dense<0.000000e+00> : vector<32x768xf32>
    %26 = tpu.matmul %24, %25, %cst_20 {dimension_numbers = #tpu.dot_dimension_numbers<[1], [0], [0], [1], [0, 0, 1, 1], [], []>} : vector<32x512xbf16>, vector<512x768xbf16>, vector<32x768xf32> -> vector<32x768xf32>
    %c0_21 = arith.constant 0 : index
    %c0_22 = arith.constant 0 : index
    %27 = vector.load %arg9[%c0_21, %c0_22] : memref<1x768xf32, #tpu.memory_space<vmem>>, vector<1x768xf32>
    %28 = vector.broadcast %27 : vector<1x768xf32> to vector<32x768xf32>
    %29 = arith.addf %26, %28 : vector<32x768xf32>
    %c0_23 = arith.constant 0 : index
    %c0_24 = arith.constant 0 : index
    %30 = vector.load %arg10[%c0_23, %c0_24] : memref<32x768xf32, #tpu.memory_space<vmem>>, vector<32x768xf32>
    tpu.vector_store %arg10[%c0_23, %c0_24], %29 {strides = array<i32>} : memref<32x768xf32, #tpu.memory_space<vmem>>, vector<32x768xf32>,
    return
  }
  func.func @transform_0(%arg0: i32) -> (i32, i32) {
    %c0_i32 = arith.constant 0 : i32
    %c0_i32_0 = arith.constant 0 : i32
    return %arg0, %c0_i32 : i32, i32
  }
  func.func @transform_1(%arg0: i32) -> (i32, i32) {
    %c0_i32 = arith.constant 0 : i32
    %c0_i32_0 = arith.constant 0 : i32
    %c0_i32_1 = arith.constant 0 : i32
    return %c0_i32, %c0_i32_0 : i32, i32
  }
  func.func @transform_2(%arg0: i32) -> (i32, i32) {
    %c0_i32 = arith.constant 0 : i32
    %c0_i32_0 = arith.constant 0 : i32
    %c0_i32_1 = arith.constant 0 : i32
    return %c0_i32, %c0_i32_0 : i32, i32
  }
  func.func @transform_3(%arg0: i32) -> (i32, i32) {
    %c0_i32 = arith.constant 0 : i32
    %c0_i32_0 = arith.constant 0 : i32
    %c0_i32_1 = arith.constant 0 : i32
    return %c0_i32, %c0_i32_0 : i32, i32
  }
  func.func @transform_4(%arg0: i32) -> (i32, i32) {
    %c0_i32 = arith.constant 0 : i32
    %c0_i32_0 = arith.constant 0 : i32
    %c0_i32_1 = arith.constant 0 : i32
    return %c0_i32, %c0_i32_0 : i32, i32
  }
  func.func @transform_5(%arg0: i32) -> (i32, i32) {
    %c0_i32 = arith.constant 0 : i32
    %c0_i32_0 = arith.constant 0 : i32
    %c0_i32_1 = arith.constant 0 : i32
    return %c0_i32, %c0_i32_0 : i32, i32
  }
  func.func @transform_6(%arg0: i32) -> (i32, i32) {
    %c0_i32 = arith.constant 0 : i32
    %c0_i32_0 = arith.constant 0 : i32
    %c0_i32_1 = arith.constant 0 : i32
    return %c0_i32, %c0_i32_0 : i32, i32
  }
  func.func @transform_7(%arg0: i32) -> (i32, i32) {
    %c0_i32 = arith.constant 0 : i32
    %c0_i32_0 = arith.constant 0 : i32
    %c0_i32_1 = arith.constant 0 : i32
    return %c0_i32, %c0_i32_0 : i32, i32
  }
  func.func @transform_8(%arg0: i32) -> (i32, i32) {
    %c0_i32 = arith.constant 0 : i32
    %c0_i32_0 = arith.constant 0 : i32
    %c0_i32_1 = arith.constant 0 : i32
    return %c0_i32, %c0_i32_0 : i32, i32
  }
  func.func @transform_9(%arg0: i32) -> (i32, i32) {
    %c0_i32 = arith.constant 0 : i32
    %c0_i32_0 = arith.constant 0 : i32
    return %arg0, %c0_i32 : i32, i32
  }
}

</mosaic_0001>

<llo_original>
// kernel: patch_producer_forward.1
$region0: #{patch_producer_forward.1}
  #allocation0 [shape = 'u32[]', space=smem, size = 0x4, offset = 0x4, fixed_abs, tag = 'smem constant byte address 0x4 - core index']
  #allocation1 [shape = 'u32[144,128]{1,0:T(1,128)}', space=vmem, size = 0x12000, scoped, tag = 'internal scratch']
  %s0 = inlined_call_operand.vmem [shape: bf16[32,128], index: 0, kind: input, shape index: {}]
  %s1 = inlined_call_operand.vmem [shape: bf16[128,128], index: 1, kind: input, shape index: {}]
  %s2 = inlined_call_operand.vmem [shape: f32[1,128], index: 2, kind: input, shape index: {}]
  %s3 = inlined_call_operand.vmem [shape: bf16[128,256], index: 3, kind: input, shape index: {}]
  %s4 = inlined_call_operand.vmem [shape: f32[1,256], index: 4, kind: input, shape index: {}]
  %s5 = inlined_call_operand.vmem [shape: bf16[256,512], index: 5, kind: input, shape index: {}]
  %s6 = inlined_call_operand.vmem [shape: f32[1,512], index: 6, kind: input, shape index: {}]
  %s7 = inlined_call_operand.vmem [shape: bf16[512,768], index: 7, kind: input, shape index: {}]
  %s8 = inlined_call_operand.vmem [shape: f32[1,768], index: 8, kind: input, shape index: {}]
  %s9 = inlined_call_operand.vmem [shape: f32[32,768], index: 9, kind: output, shape index: {}]
  %s10 = sld [smem:[#allocation0]]
  $region46: #{patch_producer_forward.1} parent=0
    _
  %s12 = ssub.s32 1, %s10
  %s13 = scalar_select 0, %s12, %s10
  // Predicated region
  $region2: #{patch_producer_forward.1} parent=0 // pred_check
    _
  $region3: #{patch_producer_forward.1} parent=0 // pred_check_branch
    %15 = sbr.rel (0) target = $region5
  $region4: #{patch_producer_forward.1} parent=0 // pred_region
    _
  $region5: #{patch_producer_forward.1} parent=0 // pred_fallthru
    _
  // Predicated region
  $region6: #{patch_producer_forward.1} parent=0 // pred_check
    _
  $region7: #{patch_producer_forward.1} parent=0 // pred_check_branch
    %17 = sbr.rel (0) target = $region9
  $region8: #{patch_producer_forward.1} parent=0 // pred_region
    _
  $region9: #{patch_producer_forward.1} parent=0 // pred_fallthru
    _
  // Predicated region
  $region10: #{patch_producer_forward.1} parent=0 // pred_check
    _
  $region11: #{patch_producer_forward.1} parent=0 // pred_check_branch
    %19 = sbr.rel (0) target = $region13
  $region12: #{patch_producer_forward.1} parent=0 // pred_region
    _
  $region13: #{patch_producer_forward.1} parent=0 // pred_fallthru
    _
  // Predicated region
  $region14: #{patch_producer_forward.1} parent=0 // pred_check
    _
  $region15: #{patch_producer_forward.1} parent=0 // pred_check_branch
    %21 = sbr.rel (0) target = $region17
  $region16: #{patch_producer_forward.1} parent=0 // pred_region
    _
  $region17: #{patch_producer_forward.1} parent=0 // pred_fallthru
    _
  // Predicated region
  $region18: #{patch_producer_forward.1} parent=0 // pred_check
    _
  $region19: #{patch_producer_forward.1} parent=0 // pred_check_branch
    %23 = sbr.rel (0) target = $region21
  $region20: #{patch_producer_forward.1} parent=0 // pred_region
    _
  $region21: #{patch_producer_forward.1} parent=0 // pred_fallthru
    _
  // Predicated region
  $region22: #{patch_producer_forward.1} parent=0 // pred_check
    _
  $region23: #{patch_producer_forward.1} parent=0 // pred_check_branch
    %25 = sbr.rel (0) target = $region25
  $region24: #{patch_producer_forward.1} parent=0 // pred_region
    _
  $region25: #{patch_producer_forward.1} parent=0 // pred_fallthru
    _
  // Predicated region
  $region26: #{patch_producer_forward.1} parent=0 // pred_check
    _
  $region27: #{patch_producer_forward.1} parent=0 // pred_check_branch
    %27 = sbr.rel (0) target = $region29
  $region28: #{patch_producer_forward.1} parent=0 // pred_region
    _
  $region29: #{patch_producer_forward.1} parent=0 // pred_fallthru
    _
  // Predicated region
  $region30: #{patch_producer_forward.1} parent=0 // pred_check
    _
  $region31: #{patch_producer_forward.1} parent=0 // pred_check_branch
    %29 = sbr.rel (0) target = $region33
  $region32: #{patch_producer_forward.1} parent=0 // pred_region
    _
  $region33: #{patch_producer_forward.1} parent=0 // pred_fallthru
    _
  // Predicated region
  $region34: #{patch_producer_forward.1} parent=0 // pred_check
    _
  $region35: #{patch_producer_forward.1} parent=0 // pred_check_branch
    %31 = sbr.rel (0) target = $region37
  $region36: #{patch_producer_forward.1} parent=0 // pred_region
    _
  $region37: #{patch_producer_forward.1} parent=0 // pred_fallthru
    _
  %v33 = vld [vmem:[%s0] sm:$0xf]
  %v34 = vld [vmem:[%s0 + $0x4] sm:$0xf]
  %v35 = vld [vmem:[%s0 + $0x8] sm:$0xf]
  %v36 = vld [vmem:[%s0 + $0xc] sm:$0xf]
  %v37 = vld [vmem:[%s1] sm:$0xf]
  %v38 = vld [vmem:[%s1 + $0x4] sm:$0xf]
  %v39 = vld [vmem:[%s1 + $0x8] sm:$0xf]
  %v40 = vld [vmem:[%s1 + $0xc] sm:$0xf]
  %v41 = vld [vmem:[%s1 + $0x10] sm:$0xf]
  %v42 = vld [vmem:[%s1 + $0x14] sm:$0xf]
  %v43 = vld [vmem:[%s1 + $0x18] sm:$0xf]
  %v44 = vld [vmem:[%s1 + $0x1c] sm:$0xf]
  %v45 = vld [vmem:[%s1 + $0x20] sm:$0xf]
  %v46 = vld [vmem:[%s1 + $0x24] sm:$0xf]
  %v47 = vld [vmem:[%s1 + $0x28] sm:$0xf]
  %v48 = vld [vmem:[%s1 + $0x2c] sm:$0xf]
  %v49 = vld [vmem:[%s1 + $0x30] sm:$0xf]
  %v50 = vld [vmem:[%s1 + $0x34] sm:$0xf]
  %v51 = vld [vmem:[%s1 + $0x38] sm:$0xf]
  %v52 = vld [vmem:[%s1 + $0x3c] sm:$0xf]
  %v53 = vld [vmem:[%s2] sm:$0x1]
  %v55 = vlaneseq
  %v56 = vshrl.u32 %v55, 7
  %v57 = vsub.s32 0, %v56
  %v58 = vrot.slane %v53, %v57
  %v64 = vunpack.c.l.b16 %v33
  %v65 = vunpack.c.l.b16 %v34
  %v66 = vunpack.c.l.b16 %v35
  %v67 = vunpack.c.l.b16 %v36
  %v68 = vpack.c.b16 %v65, %v64
  %v69 = vpack.c.b16 %v67, %v66
  %v88 = vunpack.c.l.b16 %v37
  %v89 = vunpack.c.l.b16 %v38
  %v90 = vunpack.c.l.b16 %v39
  %v91 = vunpack.c.l.b16 %v40
  %v92 = vunpack.c.l.b16 %v41
  %v93 = vunpack.c.l.b16 %v42
  %v94 = vunpack.c.l.b16 %v43
  %v95 = vunpack.c.l.b16 %v44
  %v96 = vunpack.c.l.b16 %v45
  %v97 = vunpack.c.l.b16 %v46
  %v98 = vunpack.c.l.b16 %v47
  %v99 = vunpack.c.l.b16 %v48
  %v100 = vunpack.c.l.b16 %v49
  %v101 = vunpack.c.l.b16 %v50
  %v102 = vunpack.c.l.b16 %v51
  %v103 = vunpack.c.l.b16 %v52
  %v104 = vpack.c.b16 %v89, %v88
  %v105 = vpack.c.b16 %v91, %v90
  %v106 = vpack.c.b16 %v93, %v92
  %v107 = vpack.c.b16 %v95, %v94
  %v108 = vpack.c.b16 %v97, %v96
  %v109 = vpack.c.b16 %v99, %v98
  %v110 = vpack.c.b16 %v101, %v100
  %v111 = vpack.c.b16 %v103, %v102
  %120 = vmatprep.subr.bf16.mxu0 0
  %121 = vmatpush1.bf16.msra.mxu0 %v104
  %122 = vmatprep.subr.bf16.mxu0 0
  %123 = vmatpush1.bf16.msra.mxu0 %v105
  %124 = vmatprep.subr.bf16.mxu0 0
  %125 = vmatpush1.bf16.msra.mxu0 %v106
  %126 = vmatprep.subr.bf16.mxu0 0
  %127 = vmatpush1.bf16.msra.mxu0 %v107
  %128 = vmatprep.subr.bf16.mxu0 0
  %129 = vmatpush1.bf16.msra.mxu0 %v108
  %130 = vmatprep.subr.bf16.mxu0 0
  %131 = vmatpush1.bf16.msra.mxu0 %v109
  %132 = vmatprep.subr.bf16.mxu0 0
  %133 = vmatpush1.bf16.msra.mxu0 %v110
  %134 = vmatprep.subr.bf16.mxu0 0
  %135 = vmatpush1.bf16.msra.mxu0 %v111
  %136 = vmatprep.subr.bf16.mxu0 0
  %137 = vmatpush1.bf16.msra.mxu0 0
  %138 = vmatprep.subr.bf16.mxu0 0
  %139 = vmatpush1.bf16.msra.mxu0 0
  %140 = vmatprep.subr.bf16.mxu0 0
  %141 = vmatpush1.bf16.msra.mxu0 0
  %142 = vmatprep.subr.bf16.mxu0 0
  %143 = vmatpush1.bf16.msra.mxu0 0
  %144 = vmatprep.subr.bf16.mxu0 0
  %145 = vmatpush1.bf16.msra.mxu0 0
  %146 = vmatprep.subr.bf16.mxu0 0
  %147 = vmatpush1.bf16.msra.mxu0 0
  %148 = vmatprep.subr.bf16.mxu0 0
  %149 = vmatpush1.bf16.msra.mxu0 0
  %150 = vmatprep.subr.bf16.mxu0 0
  %151 = vmatpush1.bf16.msra.mxu0 0
  %152 = vmatprep.mubr.bf16.mxu0 0
  %153 = vmatmul.mubr.bf16.gmra.mrb[0].mxu0 %v68
  %v154 = vpop.f32.mrb[0].mxu0
  %v155 = vadd.f32 %v58, %v154
  %v156 = vpop.f32.mrb[0].mxu0
  %v157 = vpop.f32.mrb[0].mxu0
  %v158 = vadd.f32 %v58, %v157
  %v159 = vpop.f32.mrb[0].mxu0
  %160 = vmatprep.mubr.bf16.mxu0 0
  %161 = vmatmul.mubr.bf16.gmra.mrb[0].mxu0 %v69
  %v162 = vpop.f32.mrb[0].mxu0
  %v163 = vadd.f32 %v58, %v162
  %v164 = vpop.f32.mrb[0].mxu0
  %v165 = vpop.f32.mrb[0].mxu0
  %v166 = vadd.f32 %v58, %v165
  %v167 = vpop.f32.mrb[0].mxu0
  %168 = vdwg.mxu0
  %v169 = vmax.f32 %v155, 0.0
  %v170 = vmax.f32 %v158, 0.0
  %v171 = vmax.f32 %v163, 0.0
  %v172 = vmax.f32 %v166, 0.0
  %v173 = vpack.c.bf16 %v170, %v169
  %v174 = vpack.c.bf16 %v172, %v171
  %v175 = vld [vmem:[%s3] sm:$0xff]
  %v176 = vld [vmem:[%s3 + $0x8] sm:$0xff]
  %v177 = vld [vmem:[%s3 + $0x10] sm:$0xff]
  %v178 = vld [vmem:[%s3 + $0x18] sm:$0xff]
  %v179 = vld [vmem:[%s3 + $0x20] sm:$0xff]
  %v180 = vld [vmem:[%s3 + $0x28] sm:$0xff]
  %v181 = vld [vmem:[%s3 + $0x30] sm:$0xff]
  %v182 = vld [vmem:[%s3 + $0x38] sm:$0xff]
  %v183 = vld [vmem:[%s3 + $0x40] sm:$0xff]
  %v184 = vld [vmem:[%s3 + $0x48] sm:$0xff]
  %v185 = vld [vmem:[%s3 + $0x50] sm:$0xff]
  %v186 = vld [vmem:[%s3 + $0x58] sm:$0xff]
  %v187 = vld [vmem:[%s3 + $0x60] sm:$0xff]
  %v188 = vld [vmem:[%s3 + $0x68] sm:$0xff]
  %v189 = vld [vmem:[%s3 + $0x70] sm:$0xff]
  %v190 = vld [vmem:[%s3 + $0x78] sm:$0xff]
  %v191 = vld [vmem:[%s4] sm:$0x3]
  %v193 = vlaneseq
  %v194 = vshrl.u32 %v193, 7
  %v195 = vsub.s32 0, %v194
  %v196 = vrot.slane %v191, %v195
  %v197 = vlaneseq
  %v198 = vshrl.u32 %v197, 7
  %v199 = vsub.s32 1, %v198
  %v200 = vrot.slane %v191, %v199
  %v219 = vunpack.c.l.b16 %v175
  %v220 = vunpack.c.h.b16 %v175
  %v221 = vunpack.c.l.b16 %v176
  %v222 = vunpack.c.h.b16 %v176
  %v223 = vunpack.c.l.b16 %v177
  %v224 = vunpack.c.h.b16 %v177
  %v225 = vunpack.c.l.b16 %v178
  %v226 = vunpack.c.h.b16 %v178
  %v227 = vunpack.c.l.b16 %v179
  %v228 = vunpack.c.h.b16 %v179
  %v229 = vunpack.c.l.b16 %v180
  %v230 = vunpack.c.h.b16 %v180
  %v231 = vunpack.c.l.b16 %v181
  %v232 = vunpack.c.h.b16 %v181
  %v233 = vunpack.c.l.b16 %v182
  %v234 = vunpack.c.h.b16 %v182
  %v235 = vunpack.c.l.b16 %v183
  %v236 = vunpack.c.h.b16 %v183
  %v237 = vunpack.c.l.b16 %v184
  %v238 = vunpack.c.h.b16 %v184
  %v239 = vunpack.c.l.b16 %v185
  %v240 = vunpack.c.h.b16 %v185
  %v241 = vunpack.c.l.b16 %v186
  %v242 = vunpack.c.h.b16 %v186
  %v243 = vunpack.c.l.b16 %v187
  %v244 = vunpack.c.h.b16 %v187
  %v245 = vunpack.c.l.b16 %v188
  %v246 = vunpack.c.h.b16 %v188
  %v247 = vunpack.c.l.b16 %v189
  %v248 = vunpack.c.h.b16 %v189
  %v249 = vunpack.c.l.b16 %v190
  %v250 = vunpack.c.h.b16 %v190
  %v251 = vpack.c.b16 %v221, %v219
  %v252 = vpack.c.b16 %v222, %v220
  %v253 = vpack.c.b16 %v225, %v223
  %v254 = vpack.c.b16 %v226, %v224
  %v255 = vpack.c.b16 %v229, %v227
  %v256 = vpack.c.b16 %v230, %v228
  %v257 = vpack.c.b16 %v233, %v231
  %v258 = vpack.c.b16 %v234, %v232
  %v259 = vpack.c.b16 %v237, %v235
  %v260 = vpack.c.b16 %v238, %v236
  %v261 = vpack.c.b16 %v241, %v239
  %v262 = vpack.c.b16 %v242, %v240
  %v263 = vpack.c.b16 %v245, %v243
  %v264 = vpack.c.b16 %v246, %v244
  %v265 = vpack.c.b16 %v249, %v247
  %v266 = vpack.c.b16 %v250, %v248
  %283 = vmatprep.subr.bf16.mxu0 %v252
  %284 = vmatpush1.bf16.msra.mxu0 %v251
  %285 = vmatprep.subr.bf16.mxu0 %v254
  %286 = vmatpush1.bf16.msra.mxu0 %v253
  %287 = vmatprep.subr.bf16.mxu0 %v256
  %288 = vmatpush1.bf16.msra.mxu0 %v255
  %289 = vmatprep.subr.bf16.mxu0 %v258
  %290 = vmatpush1.bf16.msra.mxu0 %v257
  %291 = vmatprep.subr.bf16.mxu0 %v260
  %292 = vmatpush1.bf16.msra.mxu0 %v259
  %293 = vmatprep.subr.bf16.mxu0 %v262
  %294 = vmatpush1.bf16.msra.mxu0 %v261
  %295 = vmatprep.subr.bf16.mxu0 %v264
  %296 = vmatpush1.bf16.msra.mxu0 %v263
  %297 = vmatprep.subr.bf16.mxu0 %v266
  %298 = vmatpush1.bf16.msra.mxu0 %v265
  %299 = vmatprep.subr.bf16.mxu0 0
  %300 = vmatpush1.bf16.msra.mxu0 0
  %301 = vmatprep.subr.bf16.mxu0 0
  %302 = vmatpush1.bf16.msra.mxu0 0
  %303 = vmatprep.subr.bf16.mxu0 0
  %304 = vmatpush1.bf16.msra.mxu0 0
  %305 = vmatprep.subr.bf16.mxu0 0
  %306 = vmatpush1.bf16.msra.mxu0 0
  %307 = vmatprep.subr.bf16.mxu0 0
  %308 = vmatpush1.bf16.msra.mxu0 0
  %309 = vmatprep.subr.bf16.mxu0 0
  %310 = vmatpush1.bf16.msra.mxu0 0
  %311 = vmatprep.subr.bf16.mxu0 0
  %312 = vmatpush1.bf16.msra.mxu0 0
  %313 = vmatprep.subr.bf16.mxu0 0
  %314 = vmatpush1.bf16.msra.mxu0 0
  %315 = vmatprep.mubr.bf16.mxu0 0
  %316 = vmatmul.mubr.bf16.gmra.mrb[0].mxu0 %v173
  %v317 = vpop.f32.mrb[0].mxu0
  %v318 = vadd.f32 %v196, %v317
  %v319 = vpop.f32.mrb[0].mxu0
  %v320 = vadd.f32 %v200, %v319
  %v321 = vpop.f32.mrb[0].mxu0
  %v322 = vadd.f32 %v196, %v321
  %v323 = vpop.f32.mrb[0].mxu0
  %v324 = vadd.f32 %v200, %v323
  %325 = vmatprep.mubr.bf16.mxu0 0
  %326 = vmatmul.mubr.bf16.gmra.mrb[0].mxu0 %v174
  %v327 = vpop.f32.mrb[0].mxu0
  %v328 = vadd.f32 %v196, %v327
  %v329 = vpop.f32.mrb[0].mxu0
  %v330 = vadd.f32 %v200, %v329
  %v331 = vpop.f32.mrb[0].mxu0
  %v332 = vadd.f32 %v196, %v331
  %v333 = vpop.f32.mrb[0].mxu0
  %v334 = vadd.f32 %v200, %v333
  %335 = vdwg.mxu0
  %v336 = vmax.f32 %v318, 0.0
  %v337 = vmax.f32 %v320, 0.0
  %v338 = vmax.f32 %v322, 0.0
  %v339 = vmax.f32 %v324, 0.0
  %v340 = vmax.f32 %v328, 0.0
  %v341 = vmax.f32 %v330, 0.0
  %v342 = vmax.f32 %v332, 0.0
  %v343 = vmax.f32 %v334, 0.0
  %v344 = vpack.c.bf16 %v338, %v336
  %v345 = vpack.c.bf16 %v339, %v337
  %v346 = vpack.c.bf16 %v342, %v340
  %v347 = vpack.c.bf16 %v343, %v341
  %v348 = vld [vmem:[%s5] sm:$0xff]
  %v349 = vld [vmem:[%s5 + $0x8] sm:$0xff]
  %v350 = vld [vmem:[%s5 + $0x10] sm:$0xff]
  %v351 = vld [vmem:[%s5 + $0x18] sm:$0xff]
  %v352 = vld [vmem:[%s5 + $0x20] sm:$0xff]
  %v353 = vld [vmem:[%s5 + $0x28] sm:$0xff]
  %v354 = vld [vmem:[%s5 + $0x30] sm:$0xff]
  %v355 = vld [vmem:[%s5 + $0x38] sm:$0xff]
  %v356 = vld [vmem:[%s5 + $0x40] sm:$0xff]
  %v357 = vld [vmem:[%s5 + $0x48] sm:$0xff]
  %v358 = vld [vmem:[%s5 + $0x50] sm:$0xff]
  %v359 = vld [vmem:[%s5 + $0x58] sm:$0xff]
  %v360 = vld [vmem:[%s5 + $0x60] sm:$0xff]
  %v361 = vld [vmem:[%s5 + $0x68] sm:$0xff]
  %v362 = vld [vmem:[%s5 + $0x70] sm:$0xff]
  %v363 = vld [vmem:[%s5 + $0x78] sm:$0xff]
  %v364 = vld [vmem:[%s5 + $0x80] sm:$0xff]
  %v365 = vld [vmem:[%s5 + $0x88] sm:$0xff]
  %v366 = vld [vmem:[%s5 + $0x90] sm:$0xff]
  %v367 = vld [vmem:[%s5 + $0x98] sm:$0xff]
  %v368 = vld [vmem:[%s5 + $0xa0] sm:$0xff]
  %v369 = vld [vmem:[%s5 + $0xa8] sm:$0xff]
  %v370 = vld [vmem:[%s5 + $0xb0] sm:$0xff]
  %v371 = vld [vmem:[%s5 + $0xb8] sm:$0xff]
  %v372 = vld [vmem:[%s5 + $0xc0] sm:$0xff]
  %v373 = vld [vmem:[%s5 + $0xc8] sm:$0xff]
  %v374 = vld [vmem:[%s5 + $0xd0] sm:$0xff]
  %v375 = vld [vmem:[%s5 + $0xd8] sm:$0xff]
  %v376 = vld [vmem:[%s5 + $0xe0] sm:$0xff]
  %v377 = vld [vmem:[%s5 + $0xe8] sm:$0xff]
  %v378 = vld [vmem:[%s5 + $0xf0] sm:$0xff]
  %v379 = vld [vmem:[%s5 + $0xf8] sm:$0xff]
  %v380 = vld [vmem:[%s5 + $0x100] sm:$0xff]
  %v381 = vld [vmem:[%s5 + $0x108] sm:$0xff]
  %v382 = vld [vmem:[%s5 + $0x110] sm:$0xff]
  %v383 = vld [vmem:[%s5 + $0x118] sm:$0xff]
  %v384 = vld [vmem:[%s5 + $0x120] sm:$0xff]
  %v385 = vld [vmem:[%s5 + $0x128] sm:$0xff]
  %v386 = vld [vmem:[%s5 + $0x130] sm:$0xff]
  %v387 = vld [vmem:[%s5 + $0x138] sm:$0xff]
  %v388 = vld [vmem:[%s5 + $0x140] sm:$0xff]
  %v389 = vld [vmem:[%s5 + $0x148] sm:$0xff]
  %v390 = vld [vmem:[%s5 + $0x150] sm:$0xff]
  %v391 = vld [vmem:[%s5 + $0x158] sm:$0xff]
  %v392 = vld [vmem:[%s5 + $0x160] sm:$0xff]
  %v393 = vld [vmem:[%s5 + $0x168] sm:$0xff]
  %v394 = vld [vmem:[%s5 + $0x170] sm:$0xff]
  %v395 = vld [vmem:[%s5 + $0x178] sm:$0xff]
  %v396 = vld [vmem:[%s5 + $0x180] sm:$0xff]
  %v397 = vld [vmem:[%s5 + $0x188] sm:$0xff]
  %v398 = vld [vmem:[%s5 + $0x190] sm:$0xff]
  %v399 = vld [vmem:[%s5 + $0x198] sm:$0xff]
  %v400 = vld [vmem:[%s5 + $0x1a0] sm:$0xff]
  %v401 = vld [vmem:[%s5 + $0x1a8] sm:$0xff]
  %v402 = vld [vmem:[%s5 + $0x1b0] sm:$0xff]
  %v403 = vld [vmem:[%s5 + $0x1b8] sm:$0xff]
  %v404 = vld [vmem:[%s5 + $0x1c0] sm:$0xff]
  %v405 = vld [vmem:[%s5 + $0x1c8] sm:$0xff]
  %v406 = vld [vmem:[%s5 + $0x1d0] sm:$0xff]
  %v407 = vld [vmem:[%s5 + $0x1d8] sm:$0xff]
  %v408 = vld [vmem:[%s5 + $0x1e0] sm:$0xff]
  %v409 = vld [vmem:[%s5 + $0x1e8] sm:$0xff]
  %v410 = vld [vmem:[%s5 + $0x1f0] sm:$0xff]
  %v411 = vld [vmem:[%s5 + $0x1f8] sm:$0xff]
  %v412 = vld [vmem:[%s6] sm:$0xf]
  %v414 = vlaneseq
  %v415 = vshrl.u32 %v414, 7
  %v416 = vsub.s32 0, %v415
  %v417 = vrot.slane %v412, %v416
  %v418 = vlaneseq
  %v419 = vshrl.u32 %v418, 7
  %v420 = vsub.s32 1, %v419
  %v421 = vrot.slane %v412, %v420
  %v422 = vlaneseq
  %v423 = vshrl.u32 %v422, 7
  %v424 = vsub.s32 2, %v423
  %v425 = vrot.slane %v412, %v424
  %v426 = vlaneseq
  %v427 = vshrl.u32 %v426, 7
  %v428 = vsub.s32 3, %v427
  %v429 = vrot.slane %v412, %v428
  %v498 = vunpack.c.l.b16 %v348
  %v499 = vunpack.c.h.b16 %v348
  %v500 = vunpack.c.l.b16 %v349
  %v501 = vunpack.c.h.b16 %v349
  %v502 = vunpack.c.l.b16 %v350
  %v503 = vunpack.c.h.b16 %v350
  %v504 = vunpack.c.l.b16 %v351
  %v505 = vunpack.c.h.b16 %v351
  %v506 = vunpack.c.l.b16 %v352
  %v507 = vunpack.c.h.b16 %v352
  %v508 = vunpack.c.l.b16 %v353
  %v509 = vunpack.c.h.b16 %v353
  %v510 = vunpack.c.l.b16 %v354
  %v511 = vunpack.c.h.b16 %v354
  %v512 = vunpack.c.l.b16 %v355
  %v513 = vunpack.c.h.b16 %v355
  %v514 = vunpack.c.l.b16 %v356
  %v515 = vunpack.c.h.b16 %v356
  %v516 = vunpack.c.l.b16 %v357
  %v517 = vunpack.c.h.b16 %v357
  %v518 = vunpack.c.l.b16 %v358
  %v519 = vunpack.c.h.b16 %v358
  %v520 = vunpack.c.l.b16 %v359
  %v521 = vunpack.c.h.b16 %v359
  %v522 = vunpack.c.l.b16 %v360
  %v523 = vunpack.c.h.b16 %v360
  %v524 = vunpack.c.l.b16 %v361
  %v525 = vunpack.c.h.b16 %v361
  %v526 = vunpack.c.l.b16 %v362
  %v527 = vunpack.c.h.b16 %v362
  %v528 = vunpack.c.l.b16 %v363
  %v529 = vunpack.c.h.b16 %v363
  %v530 = vunpack.c.l.b16 %v364
  %v531 = vunpack.c.h.b16 %v364
  %v532 = vunpack.c.l.b16 %v365
  %v533 = vunpack.c.h.b16 %v365
  %v534 = vunpack.c.l.b16 %v366
  %v535 = vunpack.c.h.b16 %v366
  %v536 = vunpack.c.l.b16 %v367
  %v537 = vunpack.c.h.b16 %v367
  %v538 = vunpack.c.l.b16 %v368
  %v539 = vunpack.c.h.b16 %v368
  %v540 = vunpack.c.l.b16 %v369
  %v541 = vunpack.c.h.b16 %v369
  %v542 = vunpack.c.l.b16 %v370
  %v543 = vunpack.c.h.b16 %v370
  %v544 = vunpack.c.l.b16 %v371
  %v545 = vunpack.c.h.b16 %v371
  %v546 = vunpack.c.l.b16 %v372
  %v547 = vunpack.c.h.b16 %v372
  %v548 = vunpack.c.l.b16 %v373
  %v549 = vunpack.c.h.b16 %v373
  %v550 = vunpack.c.l.b16 %v374
  %v551 = vunpack.c.h.b16 %v374
  %v552 = vunpack.c.l.b16 %v375
  %v553 = vunpack.c.h.b16 %v375
  %v554 = vunpack.c.l.b16 %v376
  %v555 = vunpack.c.h.b16 %v376
  %v556 = vunpack.c.l.b16 %v377
  %v557 = vunpack.c.h.b16 %v377
  %v558 = vunpack.c.l.b16 %v378
  %v559 = vunpack.c.h.b16 %v378
  %v560 = vunpack.c.l.b16 %v379
  %v561 = vunpack.c.h.b16 %v379
  %v562 = vunpack.c.l.b16 %v380
  %v563 = vunpack.c.h.b16 %v380
  %v564 = vunpack.c.l.b16 %v381
  %v565 = vunpack.c.h.b16 %v381
  %v566 = vunpack.c.l.b16 %v382
  %v567 = vunpack.c.h.b16 %v382
  %v568 = vunpack.c.l.b16 %v383
  %v569 = vunpack.c.h.b16 %v383
  %v570 = vunpack.c.l.b16 %v384
  %v571 = vunpack.c.h.b16 %v384
  %v572 = vunpack.c.l.b16 %v385
  %v573 = vunpack.c.h.b16 %v385
  %v574 = vunpack.c.l.b16 %v386
  %v575 = vunpack.c.h.b16 %v386
  %v576 = vunpack.c.l.b16 %v387
  %v577 = vunpack.c.h.b16 %v387
  %v578 = vunpack.c.l.b16 %v388
  %v579 = vunpack.c.h.b16 %v388
  %v580 = vunpack.c.l.b16 %v389
  %v581 = vunpack.c.h.b16 %v389
  %v582 = vunpack.c.l.b16 %v390
  %v583 = vunpack.c.h.b16 %v390
  %v584 = vunpack.c.l.b16 %v391
  %v585 = vunpack.c.h.b16 %v391
  %v586 = vunpack.c.l.b16 %v392
  %v587 = vunpack.c.h.b16 %v392
  %v588 = vunpack.c.l.b16 %v393
  %v589 = vunpack.c.h.b16 %v393
  %v590 = vunpack.c.l.b16 %v394
  %v591 = vunpack.c.h.b16 %v394
  %v592 = vunpack.c.l.b16 %v395
  %v593 = vunpack.c.h.b16 %v395
  %v594 = vunpack.c.l.b16 %v396
  %v595 = vunpack.c.h.b16 %v396
  %v596 = vunpack.c.l.b16 %v397
  %v597 = vunpack.c.h.b16 %v397
  %v598 = vunpack.c.l.b16 %v398
  %v599 = vunpack.c.h.b16 %v398
  %v600 = vunpack.c.l.b16 %v399
  %v601 = vunpack.c.h.b16 %v399
  %v602 = vunpack.c.l.b16 %v400
  %v603 = vunpack.c.h.b16 %v400
  %v604 = vunpack.c.l.b16 %v401
  %v605 = vunpack.c.h.b16 %v401
  %v606 = vunpack.c.l.b16 %v402
  %v607 = vunpack.c.h.b16 %v402
  %v608 = vunpack.c.l.b16 %v403
  %v609 = vunpack.c.h.b16 %v403
  %v610 = vunpack.c.l.b16 %v404
  %v611 = vunpack.c.h.b16 %v404
  %v612 = vunpack.c.l.b16 %v405
  %v613 = vunpack.c.h.b16 %v405
  %v614 = vunpack.c.l.b16 %v406
  %v615 = vunpack.c.h.b16 %v406
  %v616 = vunpack.c.l.b16 %v407
  %v617 = vunpack.c.h.b16 %v407
  %v618 = vunpack.c.l.b16 %v408
  %v619 = vunpack.c.h.b16 %v408
  %v620 = vunpack.c.l.b16 %v409
  %v621 = vunpack.c.h.b16 %v409
  %v622 = vunpack.c.l.b16 %v410
  %v623 = vunpack.c.h.b16 %v410
  %v624 = vunpack.c.l.b16 %v411
  %v625 = vunpack.c.h.b16 %v411
  %v626 = vpack.c.b16 %v502, %v498
  %v627 = vpack.c.b16 %v503, %v499
  %v628 = vpack.c.b16 %v504, %v500
  %v629 = vpack.c.b16 %v505, %v501
  %v630 = vpack.c.b16 %v510, %v506
  %v631 = vpack.c.b16 %v511, %v507
  %v632 = vpack.c.b16 %v512, %v508
  %v633 = vpack.c.b16 %v513, %v509
  %v634 = vpack.c.b16 %v518, %v514
  %v635 = vpack.c.b16 %v519, %v515
  %v636 = vpack.c.b16 %v520, %v516
  %v637 = vpack.c.b16 %v521, %v517
  %v638 = vpack.c.b16 %v526, %v522
  %v639 = vpack.c.b16 %v527, %v523
  %v640 = vpack.c.b16 %v528, %v524
  %v641 = vpack.c.b16 %v529, %v525
  %v642 = vpack.c.b16 %v534, %v530
  %v643 = vpack.c.b16 %v535, %v531
  %v644 = vpack.c.b16 %v536, %v532
  %v645 = vpack.c.b16 %v537, %v533
  %v646 = vpack.c.b16 %v542, %v538
  %v647 = vpack.c.b16 %v543, %v539
  %v648 = vpack.c.b16 %v544, %v540
  %v649 = vpack.c.b16 %v545, %v541
  %v650 = vpack.c.b16 %v550, %v546
  %v651 = vpack.c.b16 %v551, %v547
  %v652 = vpack.c.b16 %v552, %v548
  %v653 = vpack.c.b16 %v553, %v549
  %v654 = vpack.c.b16 %v558, %v554
  %v655 = vpack.c.b16 %v559, %v555
  %v656 = vpack.c.b16 %v560, %v556
  %v657 = vpack.c.b16 %v561, %v557
  %v658 = vpack.c.b16 %v566, %v562
  %v659 = vpack.c.b16 %v567, %v563
  %v660 = vpack.c.b16 %v568, %v564
  %v661 = vpack.c.b16 %v569, %v565
  %v662 = vpack.c.b16 %v574, %v570
  %v663 = vpack.c.b16 %v575, %v571
  %v664 = vpack.c.b16 %v576, %v572
  %v665 = vpack.c.b16 %v577, %v573
  %v666 = vpack.c.b16 %v582, %v578
  %v667 = vpack.c.b16 %v583, %v579
  %v668 = vpack.c.b16 %v584, %v580
  %v669 = vpack.c.b16 %v585, %v581
  %v670 = vpack.c.b16 %v590, %v586
  %v671 = vpack.c.b16 %v591, %v587
  %v672 = vpack.c.b16 %v592, %v588
  %v673 = vpack.c.b16 %v593, %v589
  %v674 = vpack.c.b16 %v598, %v594
  %v675 = vpack.c.b16 %v599, %v595
  %v676 = vpack.c.b16 %v600, %v596
  %v677 = vpack.c.b16 %v601, %v597
  %v678 = vpack.c.b16 %v606, %v602
  %v679 = vpack.c.b16 %v607, %v603
  %v680 = vpack.c.b16 %v608, %v604
  %v681 = vpack.c.b16 %v609, %v605
  %v682 = vpack.c.b16 %v614, %v610
  %v683 = vpack.c.b16 %v615, %v611
  %v684 = vpack.c.b16 %v616, %v612
  %v685 = vpack.c.b16 %v617, %v613
  %v686 = vpack.c.b16 %v622, %v618
  %v687 = vpack.c.b16 %v623, %v619
  %v688 = vpack.c.b16 %v624, %v620
  %v689 = vpack.c.b16 %v625, %v621
  %754 = vmatprep.subr.bf16.mxu0 %v627
  %755 = vmatpush1.bf16.msra.mxu0 %v626
  %756 = vmatprep.subr.bf16.mxu0 %v631
  %757 = vmatpush1.bf16.msra.mxu0 %v630
  %758 = vmatprep.subr.bf16.mxu0 %v635
  %759 = vmatpush1.bf16.msra.mxu0 %v634
  %760 = vmatprep.subr.bf16.mxu0 %v639
  %761 = vmatpush1.bf16.msra.mxu0 %v638
  %762 = vmatprep.subr.bf16.mxu0 %v643
  %763 = vmatpush1.bf16.msra.mxu0 %v642
  %764 = vmatprep.subr.bf16.mxu0 %v647
  %765 = vmatpush1.bf16.msra.mxu0 %v646
  %766 = vmatprep.subr.bf16.mxu0 %v651
  %767 = vmatpush1.bf16.msra.mxu0 %v650
  %768 = vmatprep.subr.bf16.mxu0 %v655
  %769 = vmatpush1.bf16.msra.mxu0 %v654
  %770 = vmatprep.subr.bf16.mxu0 %v659
  %771 = vmatpush1.bf16.msra.mxu0 %v658
  %772 = vmatprep.subr.bf16.mxu0 %v663
  %773 = vmatpush1.bf16.msra.mxu0 %v662
  %774 = vmatprep.subr.bf16.mxu0 %v667
  %775 = vmatpush1.bf16.msra.mxu0 %v666
  %776 = vmatprep.subr.bf16.mxu0 %v671
  %777 = vmatpush1.bf16.msra.mxu0 %v670
  %778 = vmatprep.subr.bf16.mxu0 %v675
  %779 = vmatpush1.bf16.msra.mxu0 %v674
  %780 = vmatprep.subr.bf16.mxu0 %v679
  %781 = vmatpush1.bf16.msra.mxu0 %v678
  %782 = vmatprep.subr.bf16.mxu0 %v683
  %783 = vmatpush1.bf16.msra.mxu0 %v682
  %784 = vmatprep.subr.bf16.mxu0 %v687
  %785 = vmatpush1.bf16.msra.mxu0 %v686
  %786 = vmatprep.mubr.bf16.mxu0 %v345
  %787 = vmatmul.mubr.bf16.gmra.mrb[0].mxu0 %v344
  %v788 = vpop.f32.mrb[0].mxu0
  %v789 = vadd.f32 %v417, %v788
  %v790 = vpop.f32.mrb[0].mxu0
  %v791 = vadd.f32 %v421, %v790
  %v792 = vpop.f32.mrb[0].mxu0
  %v793 = vadd.f32 %v417, %v792
  %v794 = vpop.f32.mrb[0].mxu0
  %v795 = vadd.f32 %v421, %v794
  %796 = vmatprep.mubr.bf16.mxu0 %v347
  %797 = vmatmul.mubr.bf16.gmra.mrb[0].mxu0 %v346
  %v798 = vpop.f32.mrb[0].mxu0
  %v799 = vadd.f32 %v417, %v798
  %v800 = vpop.f32.mrb[0].mxu0
  %v801 = vadd.f32 %v421, %v800
  %v802 = vpop.f32.mrb[0].mxu0
  %v803 = vadd.f32 %v417, %v802
  %v804 = vpop.f32.mrb[0].mxu0
  %v805 = vadd.f32 %v421, %v804
  %806 = vdwg.mxu0
  %807 = vmatprep.subr.bf16.mxu0 %v629
  %808 = vmatpush1.bf16.msra.mxu0 %v628
  %809 = vmatprep.subr.bf16.mxu0 %v633
  %810 = vmatpush1.bf16.msra.mxu0 %v632
  %811 = vmatprep.subr.bf16.mxu0 %v637
  %812 = vmatpush1.bf16.msra.mxu0 %v636
  %813 = vmatprep.subr.bf16.mxu0 %v641
  %814 = vmatpush1.bf16.msra.mxu0 %v640
  %815 = vmatprep.subr.bf16.mxu0 %v645
  %816 = vmatpush1.bf16.msra.mxu0 %v644
  %817 = vmatprep.subr.bf16.mxu0 %v649
  %818 = vmatpush1.bf16.msra.mxu0 %v648
  %819 = vmatprep.subr.bf16.mxu0 %v653
  %820 = vmatpush1.bf16.msra.mxu0 %v652
  %821 = vmatprep.subr.bf16.mxu0 %v657
  %822 = vmatpush1.bf16.msra.mxu0 %v656
  %823 = vmatprep.subr.bf16.mxu0 %v661
  %824 = vmatpush1.bf16.msra.mxu0 %v660
  %825 = vmatprep.subr.bf16.mxu0 %v665
  %826 = vmatpush1.bf16.msra.mxu0 %v664
  %827 = vmatprep.subr.bf16.mxu0 %v669
  %828 = vmatpush1.bf16.msra.mxu0 %v668
  %829 = vmatprep.subr.bf16.mxu0 %v673
  %830 = vmatpush1.bf16.msra.mxu0 %v672
  %831 = vmatprep.subr.bf16.mxu0 %v677
  %832 = vmatpush1.bf16.msra.mxu0 %v676
  %833 = vmatprep.subr.bf16.mxu0 %v681
  %834 = vmatpush1.bf16.msra.mxu0 %v680
  %835 = vmatprep.subr.bf16.mxu0 %v685
  %836 = vmatpush1.bf16.msra.mxu0 %v684
  %837 = vmatprep.subr.bf16.mxu0 %v689
  %838 = vmatpush1.bf16.msra.mxu0 %v688
  %839 = vmatprep.mubr.bf16.mxu0 %v345
  %840 = vmatmul.mubr.bf16.gmra.mrb[0].mxu0 %v344
  %v841 = vpop.f32.mrb[0].mxu0
  %v842 = vadd.f32 %v425, %v841
  %v843 = vpop.f32.mrb[0].mxu0
  %v844 = vadd.f32 %v429, %v843
  %v845 = vpop.f32.mrb[0].mxu0
  %v846 = vadd.f32 %v425, %v845
  %v847 = vpop.f32.mrb[0].mxu0
  %v848 = vadd.f32 %v429, %v847
  %849 = vmatprep.mubr.bf16.mxu0 %v347
  %850 = vmatmul.mubr.bf16.gmra.mrb[0].mxu0 %v346
  %v851 = vpop.f32.mrb[0].mxu0
  %v852 = vadd.f32 %v425, %v851
  %v853 = vpop.f32.mrb[0].mxu0
  %v854 = vadd.f32 %v429, %v853
  %v855 = vpop.f32.mrb[0].mxu0
  %v856 = vadd.f32 %v425, %v855
  %v857 = vpop.f32.mrb[0].mxu0
  %v858 = vadd.f32 %v429, %v857
  %859 = vdwg.mxu0
  %v860 = vmax.f32 %v789, 0.0
  %v861 = vmax.f32 %v791, 0.0
  %v862 = vmax.f32 %v842, 0.0
  %v863 = vmax.f32 %v844, 0.0
  %v864 = vmax.f32 %v793, 0.0
  %v865 = vmax.f32 %v795, 0.0
  %v866 = vmax.f32 %v846, 0.0
  %v867 = vmax.f32 %v848, 0.0
  %v868 = vmax.f32 %v799, 0.0
  %v869 = vmax.f32 %v801, 0.0
  %v870 = vmax.f32 %v852, 0.0
  %v871 = vmax.f32 %v854, 0.0
  %v872 = vmax.f32 %v803, 0.0
  %v873 = vmax.f32 %v805, 0.0
  %v874 = vmax.f32 %v856, 0.0
  %v875 = vmax.f32 %v858, 0.0
  %v876 = vpack.c.bf16 %v864, %v860
  %v877 = vpack.c.bf16 %v865, %v861
  %v878 = vpack.c.bf16 %v866, %v862
  %v879 = vpack.c.bf16 %v867, %v863
  %v880 = vpack.c.bf16 %v872, %v868
  %v881 = vpack.c.bf16 %v873, %v869
  %v882 = vpack.c.bf16 %v874, %v870
  %v883 = vpack.c.bf16 %v875, %v871
  %v884 = vld [vmem:[%s7] sm:$0xff]
  %v885 = vld [vmem:[%s7 + $0x8] sm:$0xff]
  %v886 = vld [vmem:[%s7 + $0x10] sm:$0xff]
  %v887 = vld [vmem:[%s7 + $0x18] sm:$0xff]
  %v888 = vld [vmem:[%s7 + $0x20] sm:$0xff]
  %v889 = vld [vmem:[%s7 + $0x28] sm:$0xff]
  %v890 = vld [vmem:[%s7 + $0x30] sm:$0xff]
  %v891 = vld [vmem:[%s7 + $0x38] sm:$0xff]
  %v892 = vld [vmem:[%s7 + $0x40] sm:$0xff]
  %v893 = vld [vmem:[%s7 + $0x48] sm:$0xff]
  %v894 = vld [vmem:[%s7 + $0x50] sm:$0xff]
  %v895 = vld [vmem:[%s7 + $0x58] sm:$0xff]
  %v896 = vld [vmem:[%s7 + $0x60] sm:$0xff]
  %v897 = vld [vmem:[%s7 + $0x68] sm:$0xff]
  %v898 = vld [vmem:[%s7 + $0x70] sm:$0xff]
  %v899 = vld [vmem:[%s7 + $0x78] sm:$0xff]
  %v900 = vld [vmem:[%s7 + $0x80] sm:$0xff]
  %v901 = vld [vmem:[%s7 + $0x88] sm:$0xff]
  %v902 = vld [vmem:[%s7 + $0x90] sm:$0xff]
  %v903 = vld [vmem:[%s7 + $0x98] sm:$0xff]
  %v904 = vld [vmem:[%s7 + $0xa0] sm:$0xff]
  %v905 = vld [vmem:[%s7 + $0xa8] sm:$0xff]
  %v906 = vld [vmem:[%s7 + $0xb0] sm:$0xff]
  %v907 = vld [vmem:[%s7 + $0xb8] sm:$0xff]
  %v908 = vld [vmem:[%s7 + $0xc0] sm:$0xff]
  %v909 = vld [vmem:[%s7 + $0xc8] sm:$0xff]
  %v910 = vld [vmem:[%s7 + $0xd0] sm:$0xff]
  %v911 = vld [vmem:[%s7 + $0xd8] sm:$0xff]
  %v912 = vld [vmem:[%s7 + $0xe0] sm:$0xff]
  %v913 = vld [vmem:[%s7 + $0xe8] sm:$0xff]
  %v914 = vld [vmem:[%s7 + $0xf0] sm:$0xff]
  %v915 = vld [vmem:[%s7 + $0xf8] sm:$0xff]
  %v916 = vld [vmem:[%s7 + $0x100] sm:$0xff]
  %v917 = vld [vmem:[%s7 + $0x108] sm:$0xff]
  %v918 = vld [vmem:[%s7 + $0x110] sm:$0xff]
  %v919 = vld [vmem:[%s7 + $0x118] sm:$0xff]
  %v920 = vld [vmem:[%s7 + $0x120] sm:$0xff]
  %v921 = vld [vmem:[%s7 + $0x128] sm:$0xff]
  %v922 = vld [vmem:[%s7 + $0x130] sm:$0xff]
  %v923 = vld [vmem:[%s7 + $0x138] sm:$0xff]
  %v924 = vld [vmem:[%s7 + $0x140] sm:$0xff]
  %v925 = vld [vmem:[%s7 + $0x148] sm:$0xff]
  %v926 = vld [vmem:[%s7 + $0x150] sm:$0xff]
  %v927 = vld [vmem:[%s7 + $0x158] sm:$0xff]
  %v928 = vld [vmem:[%s7 + $0x160] sm:$0xff]
  %v929 = vld [vmem:[%s7 + $0x168] sm:$0xff]
  %v930 = vld [vmem:[%s7 + $0x170] sm:$0xff]
  %v931 = vld [vmem:[%s7 + $0x178] sm:$0xff]
  %v932 = vld [vmem:[%s7 + $0x180] sm:$0xff]
  %v933 = vld [vmem:[%s7 + $0x188] sm:$0xff]
  %v934 = vld [vmem:[%s7 + $0x190] sm:$0xff]
  %v935 = vld [vmem:[%s7 + $0x198] sm:$0xff]
  %v936 = vld [vmem:[%s7 + $0x1a0] sm:$0xff]
  %v937 = vld [vmem:[%s7 + $0x1a8] sm:$0xff]
  %v938 = vld [vmem:[%s7 + $0x1b0] sm:$0xff]
  %v939 = vld [vmem:[%s7 + $0x1b8] sm:$0xff]
  %v940 = vld [vmem:[%s7 + $0x1c0] sm:$0xff]
  %v941 = vld [vmem:[%s7 + $0x1c8] sm:$0xff]
  %v942 = vld [vmem:[%s7 + $0x1d0] sm:$0xff]
  %v943 = vld [vmem:[%s7 + $0x1d8] sm:$0xff]
  %v944 = vld [vmem:[%s7 + $0x1e0] sm:$0xff]
  %v945 = vld [vmem:[%s7 + $0x1e8] sm:$0xff]
  %v946 = vld [vmem:[%s7 + $0x1f0] sm:$0xff]
  %v947 = vld [vmem:[%s7 + $0x1f8] sm:$0xff]
  %v948 = vld [vmem:[%s7 + $0x200] sm:$0xff]
  %v949 = vld [vmem:[%s7 + $0x208] sm:$0xff]
  %v950 = vld [vmem:[%s7 + $0x210] sm:$0xff]
  %v951 = vld [vmem:[%s7 + $0x218] sm:$0xff]
  %v952 = vld [vmem:[%s7 + $0x220] sm:$0xff]
  %v953 = vld [vmem:[%s7 + $0x228] sm:$0xff]
  %v954 = vld [vmem:[%s7 + $0x230] sm:$0xff]
  %v955 = vld [vmem:[%s7 + $0x238] sm:$0xff]
  %v956 = vld [vmem:[%s7 + $0x240] sm:$0xff]
  %v957 = vld [vmem:[%s7 + $0x248] sm:$0xff]
  %v958 = vld [vmem:[%s7 + $0x250] sm:$0xff]
  %v959 = vld [vmem:[%s7 + $0x258] sm:$0xff]
  %v960 = vld [vmem:[%s7 + $0x260] sm:$0xff]
  %v961 = vld [vmem:[%s7 + $0x268] sm:$0xff]
  %v962 = vld [vmem:[%s7 + $0x270] sm:$0xff]
  %v963 = vld [vmem:[%s7 + $0x278] sm:$0xff]
  %v964 = vld [vmem:[%s7 + $0x280] sm:$0xff]
  %v965 = vld [vmem:[%s7 + $0x288] sm:$0xff]
  %v966 = vld [vmem:[%s7 + $0x290] sm:$0xff]
  %v967 = vld [vmem:[%s7 + $0x298] sm:$0xff]
  %v968 = vld [vmem:[%s7 + $0x2a0] sm:$0xff]
  %v969 = vld [vmem:[%s7 + $0x2a8] sm:$0xff]
  %v970 = vld [vmem:[%s7 + $0x2b0] sm:$0xff]
  %v971 = vld [vmem:[%s7 + $0x2b8] sm:$0xff]
  %v972 = vld [vmem:[%s7 + $0x2c0] sm:$0xff]
  %v973 = vld [vmem:[%s7 + $0x2c8] sm:$0xff]
  %v974 = vld [vmem:[%s7 + $0x2d0] sm:$0xff]
  %v975 = vld [vmem:[%s7 + $0x2d8] sm:$0xff]
  %v976 = vld [vmem:[%s7 + $0x2e0] sm:$0xff]
  %v977 = vld [vmem:[%s7 + $0x2e8] sm:$0xff]
  %v978 = vld [vmem:[%s7 + $0x2f0] sm:$0xff]
  %v979 = vld [vmem:[%s7 + $0x2f8] sm:$0xff]
  %v980 = vld [vmem:[%s7 + $0x300] sm:$0xff]
  %v981 = vld [vmem:[%s7 + $0x308] sm:$0xff]
  %v982 = vld [vmem:[%s7 + $0x310] sm:$0xff]
  %v983 = vld [vmem:[%s7 + $0x318] sm:$0xff]
  %v984 = vld [vmem:[%s7 + $0x320] sm:$0xff]
  %v985 = vld [vmem:[%s7 + $0x328] sm:$0xff]
  %v986 = vld [vmem:[%s7 + $0x330] sm:$0xff]
  %v987 = vld [vmem:[%s7 + $0x338] sm:$0xff]
  %v988 = vld [vmem:[%s7 + $0x340] sm:$0xff]
  %v989 = vld [vmem:[%s7 + $0x348] sm:$0xff]
  %v990 = vld [vmem:[%s7 + $0x350] sm:$0xff]
  %v991 = vld [vmem:[%s7 + $0x358] sm:$0xff]
  %v992 = vld [vmem:[%s7 + $0x360] sm:$0xff]
  %v993 = vld [vmem:[%s7 + $0x368] sm:$0xff]
  %v994 = vld [vmem:[%s7 + $0x370] sm:$0xff]
  %v995 = vld [vmem:[%s7 + $0x378] sm:$0xff]
  %v996 = vld [vmem:[%s7 + $0x380] sm:$0xff]
  %v997 = vld [vmem:[%s7 + $0x388] sm:$0xff]
  %v998 = vld [vmem:[%s7 + $0x390] sm:$0xff]
  %v999 = vld [vmem:[%s7 + $0x398] sm:$0xff]
  %v1000 = vld [vmem:[%s7 + $0x3a0] sm:$0xff]
  %v1001 = vld [vmem:[%s7 + $0x3a8] sm:$0xff]
  %v1002 = vld [vmem:[%s7 + $0x3b0] sm:$0xff]
  %v1003 = vld [vmem:[%s7 + $0x3b8] sm:$0xff]
  %v1004 = vld [vmem:[%s7 + $0x3c0] sm:$0xff]
  %v1005 = vld [vmem:[%s7 + $0x3c8] sm:$0xff]
  %v1006 = vld [vmem:[%s7 + $0x3d0] sm:$0xff]
  %v1007 = vld [vmem:[%s7 + $0x3d8] sm:$0xff]
  %v1008 = vld [vmem:[%s7 + $0x3e0] sm:$0xff]
  %v1009 = vld [vmem:[%s7 + $0x3e8] sm:$0xff]
  %v1010 = vld [vmem:[%s7 + $0x3f0] sm:$0xff]
  %v1011 = vld [vmem:[%s7 + $0x3f8] sm:$0xff]
  %v1012 = vld [vmem:[%s7 + $0x400] sm:$0xff]
  %v1013 = vld [vmem:[%s7 + $0x408] sm:$0xff]
  %v1014 = vld [vmem:[%s7 + $0x410] sm:$0xff]
  %v1015 = vld [vmem:[%s7 + $0x418] sm:$0xff]
  %v1016 = vld [vmem:[%s7 + $0x420] sm:$0xff]
  %v1017 = vld [vmem:[%s7 + $0x428] sm:$0xff]
  %v1018 = vld [vmem:[%s7 + $0x430] sm:$0xff]
  %v1019 = vld [vmem:[%s7 + $0x438] sm:$0xff]
  %v1020 = vld [vmem:[%s7 + $0x440] sm:$0xff]
  %v1021 = vld [vmem:[%s7 + $0x448] sm:$0xff]
  %v1022 = vld [vmem:[%s7 + $0x450] sm:$0xff]
  %v1023 = vld [vmem:[%s7 + $0x458] sm:$0xff]
  %v1024 = vld [vmem:[%s7 + $0x460] sm:$0xff]
  %v1025 = vld [vmem:[%s7 + $0x468] sm:$0xff]
  %v1026 = vld [vmem:[%s7 + $0x470] sm:$0xff]
  %v1027 = vld [vmem:[%s7 + $0x478] sm:$0xff]
  %v1028 = vld [vmem:[%s7 + $0x480] sm:$0xff]
  %v1029 = vld [vmem:[%s7 + $0x488] sm:$0xff]
  %v1030 = vld [vmem:[%s7 + $0x490] sm:$0xff]
  %v1031 = vld [vmem:[%s7 + $0x498] sm:$0xff]
  %v1032 = vld [vmem:[%s7 + $0x4a0] sm:$0xff]
  %v1033 = vld [vmem:[%s7 + $0x4a8] sm:$0xff]
  %v1034 = vld [vmem:[%s7 + $0x4b0] sm:$0xff]
  %v1035 = vld [vmem:[%s7 + $0x4b8] sm:$0xff]
  %v1036 = vld [vmem:[%s7 + $0x4c0] sm:$0xff]
  %v1037 = vld [vmem:[%s7 + $0x4c8] sm:$0xff]
  %v1038 = vld [vmem:[%s7 + $0x4d0] sm:$0xff]
  %v1039 = vld [vmem:[%s7 + $0x4d8] sm:$0xff]
  %v1040 = vld [vmem:[%s7 + $0x4e0] sm:$0xff]
  %v1041 = vld [vmem:[%s7 + $0x4e8] sm:$0xff]
  %v1042 = vld [vmem:[%s7 + $0x4f0] sm:$0xff]
  %v1043 = vld [vmem:[%s7 + $0x4f8] sm:$0xff]
  %v1044 = vld [vmem:[%s7 + $0x500] sm:$0xff]
  %v1045 = vld [vmem:[%s7 + $0x508] sm:$0xff]
  %v1046 = vld [vmem:[%s7 + $0x510] sm:$0xff]
  %v1047 = vld [vmem:[%s7 + $0x518] sm:$0xff]
  %v1048 = vld [vmem:[%s7 + $0x520] sm:$0xff]
  %v1049 = vld [vmem:[%s7 + $0x528] sm:$0xff]
  %v1050 = vld [vmem:[%s7 + $0x530] sm:$0xff]
  %v1051 = vld [vmem:[%s7 + $0x538] sm:$0xff]
  %v1052 = vld [vmem:[%s7 + $0x540] sm:$0xff]
  %v1053 = vld [vmem:[%s7 + $0x548] sm:$0xff]
  %v1054 = vld [vmem:[%s7 + $0x550] sm:$0xff]
  %v1055 = vld [vmem:[%s7 + $0x558] sm:$0xff]
  %v1056 = vld [vmem:[%s7 + $0x560] sm:$0xff]
  %v1057 = vld [vmem:[%s7 + $0x568] sm:$0xff]
  %v1058 = vld [vmem:[%s7 + $0x570] sm:$0xff]
  %v1059 = vld [vmem:[%s7 + $0x578] sm:$0xff]
  %v1060 = vld [vmem:[%s7 + $0x580] sm:$0xff]
  %v1061 = vld [vmem:[%s7 + $0x588] sm:$0xff]
  %v1062 = vld [vmem:[%s7 + $0x590] sm:$0xff]
  %v1063 = vld [vmem:[%s7 + $0x598] sm:$0xff]
  %v1064 = vld [vmem:[%s7 + $0x5a0] sm:$0xff]
  %v1065 = vld [vmem:[%s7 + $0x5a8] sm:$0xff]
  %v1066 = vld [vmem:[%s7 + $0x5b0] sm:$0xff]
  %v1067 = vld [vmem:[%s7 + $0x5b8] sm:$0xff]
  %v1068 = vld [vmem:[%s7 + $0x5c0] sm:$0xff]
  %v1069 = vld [vmem:[%s7 + $0x5c8] sm:$0xff]
  %v1070 = vld [vmem:[%s7 + $0x5d0] sm:$0xff]
  %v1071 = vld [vmem:[%s7 + $0x5d8] sm:$0xff]
  %v1072 = vld [vmem:[%s7 + $0x5e0] sm:$0xff]
  %v1073 = vld [vmem:[%s7 + $0x5e8] sm:$0xff]
  %v1074 = vld [vmem:[%s7 + $0x5f0] sm:$0xff]
  %v1075 = vld [vmem:[%s7 + $0x5f8] sm:$0xff]
  %v1076 = vld [vmem:[%s8] sm:$0x3f]
  %v1078 = vlaneseq
  %v1079 = vshrl.u32 %v1078, 7
  %v1080 = vsub.s32 0, %v1079
  %v1081 = vrot.slane %v1076, %v1080
  %v1082 = vlaneseq
  %v1083 = vshrl.u32 %v1082, 7
  %v1084 = vsub.s32 1, %v1083
  %v1085 = vrot.slane %v1076, %v1084
  %v1086 = vlaneseq
  %v1087 = vshrl.u32 %v1086, 7
  %v1088 = vsub.s32 2, %v1087
  %v1089 = vrot.slane %v1076, %v1088
  %v1090 = vlaneseq
  %v1091 = vshrl.u32 %v1090, 7
  %v1092 = vsub.s32 3, %v1091
  %v1093 = vrot.slane %v1076, %v1092
  %v1094 = vlaneseq
  %v1095 = vshrl.u32 %v1094, 7
  %v1096 = vsub.s32 4, %v1095
  %v1097 = vrot.slane %v1076, %v1096
  %v1098 = vlaneseq
  %v1099 = vshrl.u32 %v1098, 7
  %v1100 = vsub.s32 5, %v1099
  %v1101 = vrot.slane %v1076, %v1100
  %v1300 = vunpack.c.l.b16 %v884
  %v1301 = vunpack.c.h.b16 %v884
  %v1302 = vunpack.c.l.b16 %v885
  %v1303 = vunpack.c.h.b16 %v885
  %v1304 = vunpack.c.l.b16 %v886
  %v1305 = vunpack.c.h.b16 %v886
  %v1306 = vunpack.c.l.b16 %v887
  %v1307 = vunpack.c.h.b16 %v887
  %v1308 = vunpack.c.l.b16 %v888
  %v1309 = vunpack.c.h.b16 %v888
  %v1310 = vunpack.c.l.b16 %v889
  %v1311 = vunpack.c.h.b16 %v889
  %v1312 = vunpack.c.l.b16 %v890
  %v1313 = vunpack.c.h.b16 %v890
  %v1314 = vunpack.c.l.b16 %v891
  %v1315 = vunpack.c.h.b16 %v891
  %v1316 = vunpack.c.l.b16 %v892
  %v1317 = vunpack.c.h.b16 %v892
  %v1318 = vunpack.c.l.b16 %v893
  %v1319 = vunpack.c.h.b16 %v893
  %v1320 = vunpack.c.l.b16 %v894
  %v1321 = vunpack.c.h.b16 %v894
  %v1322 = vunpack.c.l.b16 %v895
  %v1323 = vunpack.c.h.b16 %v895
  %v1324 = vunpack.c.l.b16 %v896
  %v1325 = vunpack.c.h.b16 %v896
  %v1326 = vunpack.c.l.b16 %v897
  %v1327 = vunpack.c.h.b16 %v897
  %v1328 = vunpack.c.l.b16 %v898
  %v1329 = vunpack.c.h.b16 %v898
  %v1330 = vunpack.c.l.b16 %v899
  %v1331 = vunpack.c.h.b16 %v899
  %v1332 = vunpack.c.l.b16 %v900
  %v1333 = vunpack.c.h.b16 %v900
  %v1334 = vunpack.c.l.b16 %v901
  %v1335 = vunpack.c.h.b16 %v901
  %v1336 = vunpack.c.l.b16 %v902
  %v1337 = vunpack.c.h.b16 %v902
  %v1338 = vunpack.c.l.b16 %v903
  %v1339 = vunpack.c.h.b16 %v903
  %v1340 = vunpack.c.l.b16 %v904
  %v1341 = vunpack.c.h.b16 %v904
  %v1342 = vunpack.c.l.b16 %v905
  %v1343 = vunpack.c.h.b16 %v905
  %v1344 = vunpack.c.l.b16 %v906
  %v1345 = vunpack.c.h.b16 %v906
  %v1346 = vunpack.c.l.b16 %v907
  %v1347 = vunpack.c.h.b16 %v907
  %v1348 = vunpack.c.l.b16 %v908
  %v1349 = vunpack.c.h.b16 %v908
  %v1350 = vunpack.c.l.b16 %v909
  %v1351 = vunpack.c.h.b16 %v909
  %v1352 = vunpack.c.l.b16 %v910
  %v1353 = vunpack.c.h.b16 %v910
  %v1354 = vunpack.c.l.b16 %v911
  %v1355 = vunpack.c.h.b16 %v911
  %v1356 = vunpack.c.l.b16 %v912
  %v1357 = vunpack.c.h.b16 %v912
  %v1358 = vunpack.c.l.b16 %v913
  %v1359 = vunpack.c.h.b16 %v913
  %v1360 = vunpack.c.l.b16 %v914
  %v1361 = vunpack.c.h.b16 %v914
  %v1362 = vunpack.c.l.b16 %v915
  %v1363 = vunpack.c.h.b16 %v915
  %v1364 = vunpack.c.l.b16 %v916
  %v1365 = vunpack.c.h.b16 %v916
  %v1366 = vunpack.c.l.b16 %v917
  %v1367 = vunpack.c.h.b16 %v917
  %v1368 = vunpack.c.l.b16 %v918
  %v1369 = vunpack.c.h.b16 %v918
  %v1370 = vunpack.c.l.b16 %v919
  %v1371 = vunpack.c.h.b16 %v919
  %v1372 = vunpack.c.l.b16 %v920
  %v1373 = vunpack.c.h.b16 %v920
  %v1374 = vunpack.c.l.b16 %v921
  %v1375 = vunpack.c.h.b16 %v921
  %v1376 = vunpack.c.l.b16 %v922
  %v1377 = vunpack.c.h.b16 %v922
  %v1378 = vunpack.c.l.b16 %v923
  %v1379 = vunpack.c.h.b16 %v923
  %v1380 = vunpack.c.l.b16 %v924
  %v1381 = vunpack.c.h.b16 %v924
  %v1382 = vunpack.c.l.b16 %v925
  %v1383 = vunpack.c.h.b16 %v925
  %v1384 = vunpack.c.l.b16 %v926
  %v1385 = vunpack.c.h.b16 %v926
  %v1386 = vunpack.c.l.b16 %v927
  %v1387 = vunpack.c.h.b16 %v927
  %v1388 = vunpack.c.l.b16 %v928
  %v1389 = vunpack.c.h.b16 %v928
  %v1390 = vunpack.c.l.b16 %v929
  %v1391 = vunpack.c.h.b16 %v929
  %v1392 = vunpack.c.l.b16 %v930
  %v1393 = vunpack.c.h.b16 %v930
  %v1394 = vunpack.c.l.b16 %v931
  %v1395 = vunpack.c.h.b16 %v931
  %v1396 = vunpack.c.l.b16 %v932
  %v1397 = vunpack.c.h.b16 %v932
  %v1398 = vunpack.c.l.b16 %v933
  %v1399 = vunpack.c.h.b16 %v933
  %v1400 = vunpack.c.l.b16 %v934
  %v1401 = vunpack.c.h.b16 %v934
  %v1402 = vunpack.c.l.b16 %v935
  %v1403 = vunpack.c.h.b16 %v935
  %v1404 = vunpack.c.l.b16 %v936
  %v1405 = vunpack.c.h.b16 %v936
  %v1406 = vunpack.c.l.b16 %v937
  %v1407 = vunpack.c.h.b16 %v937
  %v1408 = vunpack.c.l.b16 %v938
  %v1409 = vunpack.c.h.b16 %v938
  %v1410 = vunpack.c.l.b16 %v939
  %v1411 = vunpack.c.h.b16 %v939
  %v1412 = vunpack.c.l.b16 %v940
  %v1413 = vunpack.c.h.b16 %v940
  %v1414 = vunpack.c.l.b16 %v941
  %v1415 = vunpack.c.h.b16 %v941
  %v1416 = vunpack.c.l.b16 %v942
  %v1417 = vunpack.c.h.b16 %v942
  %v1418 = vunpack.c.l.b16 %v943
  %v1419 = vunpack.c.h.b16 %v943
  %v1420 = vunpack.c.l.b16 %v944
  %v1421 = vunpack.c.h.b16 %v944
  %v1422 = vunpack.c.l.b16 %v945
  %v1423 = vunpack.c.h.b16 %v945
  %v1424 = vunpack.c.l.b16 %v946
  %v1425 = vunpack.c.h.b16 %v946
  %v1426 = vunpack.c.l.b16 %v947
  %v1427 = vunpack.c.h.b16 %v947
  %v1428 = vunpack.c.l.b16 %v948
  %v1429 = vunpack.c.h.b16 %v948
  %v1430 = vunpack.c.l.b16 %v949
  %v1431 = vunpack.c.h.b16 %v949
  %v1432 = vunpack.c.l.b16 %v950
  %v1433 = vunpack.c.h.b16 %v950
  %v1434 = vunpack.c.l.b16 %v951
  %v1435 = vunpack.c.h.b16 %v951
  %v1436 = vunpack.c.l.b16 %v952
  %v1437 = vunpack.c.h.b16 %v952
  %v1438 = vunpack.c.l.b16 %v953
  %v1439 = vunpack.c.h.b16 %v953
  %v1440 = vunpack.c.l.b16 %v954
  %v1441 = vunpack.c.h.b16 %v954
  %v1442 = vunpack.c.l.b16 %v955
  %v1443 = vunpack.c.h.b16 %v955
  %v1444 = vunpack.c.l.b16 %v956
  %v1445 = vunpack.c.h.b16 %v956
  %v1446 = vunpack.c.l.b16 %v957
  %v1447 = vunpack.c.h.b16 %v957
  %v1448 = vunpack.c.l.b16 %v958
  %v1449 = vunpack.c.h.b16 %v958
  %v1450 = vunpack.c.l.b16 %v959
  %v1451 = vunpack.c.h.b16 %v959
  %v1452 = vunpack.c.l.b16 %v960
  %v1453 = vunpack.c.h.b16 %v960
  %v1454 = vunpack.c.l.b16 %v961
  %v1455 = vunpack.c.h.b16 %v961
  %v1456 = vunpack.c.l.b16 %v962
  %v1457 = vunpack.c.h.b16 %v962
  %v1458 = vunpack.c.l.b16 %v963
  %v1459 = vunpack.c.h.b16 %v963
  %v1460 = vunpack.c.l.b16 %v964
  %v1461 = vunpack.c.h.b16 %v964
  %v1462 = vunpack.c.l.b16 %v965
  %v1463 = vunpack.c.h.b16 %v965
  %v1464 = vunpack.c.l.b16 %v966
  %v1465 = vunpack.c.h.b16 %v966
  %v1466 = vunpack.c.l.b16 %v967
  %v1467 = vunpack.c.h.b16 %v967
  %v1468 = vunpack.c.l.b16 %v968
  %v1469 = vunpack.c.h.b16 %v968
  %v1470 = vunpack.c.l.b16 %v969
  %v1471 = vunpack.c.h.b16 %v969
  %v1472 = vunpack.c.l.b16 %v970
  %v1473 = vunpack.c.h.b16 %v970
  %v1474 = vunpack.c.l.b16 %v971
  %v1475 = vunpack.c.h.b16 %v971
  %v1476 = vunpack.c.l.b16 %v972
  %v1477 = vunpack.c.h.b16 %v972
  %v1478 = vunpack.c.l.b16 %v973
  %v1479 = vunpack.c.h.b16 %v973
  %v1480 = vunpack.c.l.b16 %v974
  %v1481 = vunpack.c.h.b16 %v974
  %v1482 = vunpack.c.l.b16 %v975
  %v1483 = vunpack.c.h.b16 %v975
  %v1484 = vunpack.c.l.b16 %v976
  %v1485 = vunpack.c.h.b16 %v976
  %v1486 = vunpack.c.l.b16 %v977
  %v1487 = vunpack.c.h.b16 %v977
  %v1488 = vunpack.c.l.b16 %v978
  %v1489 = vunpack.c.h.b16 %v978
  %v1490 = vunpack.c.l.b16 %v979
  %v1491 = vunpack.c.h.b16 %v979
  %v1492 = vunpack.c.l.b16 %v980
  %v1493 = vunpack.c.h.b16 %v980
  %v1494 = vunpack.c.l.b16 %v981
  %v1495 = vunpack.c.h.b16 %v981
  %v1496 = vunpack.c.l.b16 %v982
  %v1497 = vunpack.c.h.b16 %v982
  %v1498 = vunpack.c.l.b16 %v983
  %v1499 = vunpack.c.h.b16 %v983
  %v1500 = vunpack.c.l.b16 %v984
  %v1501 = vunpack.c.h.b16 %v984
  %v1502 = vunpack.c.l.b16 %v985
  %v1503 = vunpack.c.h.b16 %v985
  %v1504 = vunpack.c.l.b16 %v986
  %v1505 = vunpack.c.h.b16 %v986
  %v1506 = vunpack.c.l.b16 %v987
  %v1507 = vunpack.c.h.b16 %v987
  %v1508 = vunpack.c.l.b16 %v988
  %v1509 = vunpack.c.h.b16 %v988
  %v1510 = vunpack.c.l.b16 %v989
  %v1511 = vunpack.c.h.b16 %v989
  %v1512 = vunpack.c.l.b16 %v990
  %v1513 = vunpack.c.h.b16 %v990
  %v1514 = vunpack.c.l.b16 %v991
  %v1515 = vunpack.c.h.b16 %v991
  %v1516 = vunpack.c.l.b16 %v992
  %v1517 = vunpack.c.h.b16 %v992
  %v1518 = vunpack.c.l.b16 %v993
  %v1519 = vunpack.c.h.b16 %v993
  %v1520 = vunpack.c.l.b16 %v994
  %v1521 = vunpack.c.h.b16 %v994
  %v1522 = vunpack.c.l.b16 %v995
  %v1523 = vunpack.c.h.b16 %v995
  %v1524 = vunpack.c.l.b16 %v996
  %v1525 = vunpack.c.h.b16 %v996
  %v1526 = vunpack.c.l.b16 %v997
  %v1527 = vunpack.c.h.b16 %v997
  %v1528 = vunpack.c.l.b16 %v998
  %v1529 = vunpack.c.h.b16 %v998
  %v1530 = vunpack.c.l.b16 %v999
  %v1531 = vunpack.c.h.b16 %v999
  %v1532 = vunpack.c.l.b16 %v1000
  %v1533 = vunpack.c.h.b16 %v1000
  %v1534 = vunpack.c.l.b16 %v1001
  %v1535 = vunpack.c.h.b16 %v1001
  %v1536 = vunpack.c.l.b16 %v1002
  %v1537 = vunpack.c.h.b16 %v1002
  %v1538 = vunpack.c.l.b16 %v1003
  %v1539 = vunpack.c.h.b16 %v1003
  %v1540 = vunpack.c.l.b16 %v1004
  %v1541 = vunpack.c.h.b16 %v1004
  %v1542 = vunpack.c.l.b16 %v1005
  %v1543 = vunpack.c.h.b16 %v1005
  %v1544 = vunpack.c.l.b16 %v1006
  %v1545 = vunpack.c.h.b16 %v1006
  %v1546 = vunpack.c.l.b16 %v1007
  %v1547 = vunpack.c.h.b16 %v1007
  %v1548 = vunpack.c.l.b16 %v1008
  %v1549 = vunpack.c.h.b16 %v1008
  %v1550 = vunpack.c.l.b16 %v1009
  %v1551 = vunpack.c.h.b16 %v1009
  %v1552 = vunpack.c.l.b16 %v1010
  %v1553 = vunpack.c.h.b16 %v1010
  %v1554 = vunpack.c.l.b16 %v1011
  %v1555 = vunpack.c.h.b16 %v1011
  %v1556 = vunpack.c.l.b16 %v1012
  %v1557 = vunpack.c.h.b16 %v1012
  %v1558 = vunpack.c.l.b16 %v1013
  %v1559 = vunpack.c.h.b16 %v1013
  %v1560 = vunpack.c.l.b16 %v1014
  %v1561 = vunpack.c.h.b16 %v1014
  %v1562 = vunpack.c.l.b16 %v1015
  %v1563 = vunpack.c.h.b16 %v1015
  %v1564 = vunpack.c.l.b16 %v1016
  %v1565 = vunpack.c.h.b16 %v1016
  %v1566 = vunpack.c.l.b16 %v1017
  %v1567 = vunpack.c.h.b16 %v1017
  %v1568 = vunpack.c.l.b16 %v1018
  %v1569 = vunpack.c.h.b16 %v1018
  %v1570 = vunpack.c.l.b16 %v1019
  %v1571 = vunpack.c.h.b16 %v1019
  %v1572 = vunpack.c.l.b16 %v1020
  %v1573 = vunpack.c.h.b16 %v1020
  %v1574 = vunpack.c.l.b16 %v1021
  %v1575 = vunpack.c.h.b16 %v1021
  %v1576 = vunpack.c.l.b16 %v1022
  %v1577 = vunpack.c.h.b16 %v1022
  %v1578 = vunpack.c.l.b16 %v1023
  %v1579 = vunpack.c.h.b16 %v1023
  %v1580 = vunpack.c.l.b16 %v1024
  %v1581 = vunpack.c.h.b16 %v1024
  %v1582 = vunpack.c.l.b16 %v1025
  %v1583 = vunpack.c.h.b16 %v1025
  %v1584 = vunpack.c.l.b16 %v1026
  %v1585 = vunpack.c.h.b16 %v1026
  %v1586 = vunpack.c.l.b16 %v1027
  %v1587 = vunpack.c.h.b16 %v1027
  %v1588 = vunpack.c.l.b16 %v1028
  %v1589 = vunpack.c.h.b16 %v1028
  %v1590 = vunpack.c.l.b16 %v1029
  %v1591 = vunpack.c.h.b16 %v1029
  %v1592 = vunpack.c.l.b16 %v1030
  %v1593 = vunpack.c.h.b16 %v1030
  %v1594 = vunpack.c.l.b16 %v1031
  %v1595 = vunpack.c.h.b16 %v1031
  %v1596 = vunpack.c.l.b16 %v1032
  %v1597 = vunpack.c.h.b16 %v1032
  %v1598 = vunpack.c.l.b16 %v1033
  %v1599 = vunpack.c.h.b16 %v1033
  %v1600 = vunpack.c.l.b16 %v1034
  %v1601 = vunpack.c.h.b16 %v1034
  %v1602 = vunpack.c.l.b16 %v1035
  %v1603 = vunpack.c.h.b16 %v1035
  %v1604 = vunpack.c.l.b16 %v1036
  %v1605 = vunpack.c.h.b16 %v1036
  %v1606 = vunpack.c.l.b16 %v1037
  %v1607 = vunpack.c.h.b16 %v1037
  %v1608 = vunpack.c.l.b16 %v1038
  %v1609 = vunpack.c.h.b16 %v1038
  %v1610 = vunpack.c.l.b16 %v1039
  %v1611 = vunpack.c.h.b16 %v1039
  %v1612 = vunpack.c.l.b16 %v1040
  %v1613 = vunpack.c.h.b16 %v1040
  %v1614 = vunpack.c.l.b16 %v1041
  %v1615 = vunpack.c.h.b16 %v1041
  %v1616 = vunpack.c.l.b16 %v1042
  %v1617 = vunpack.c.h.b16 %v1042
  %v1618 = vunpack.c.l.b16 %v1043
  %v1619 = vunpack.c.h.b16 %v1043
  %v1620 = vunpack.c.l.b16 %v1044
  %v1621 = vunpack.c.h.b16 %v1044
  %v1622 = vunpack.c.l.b16 %v1045
  %v1623 = vunpack.c.h.b16 %v1045
  %v1624 = vunpack.c.l.b16 %v1046
  %v1625 = vunpack.c.h.b16 %v1046
  %v1626 = vunpack.c.l.b16 %v1047
  %v1627 = vunpack.c.h.b16 %v1047
  %v1628 = vunpack.c.l.b16 %v1048
  %v1629 = vunpack.c.h.b16 %v1048
  %v1630 = vunpack.c.l.b16 %v1049
  %v1631 = vunpack.c.h.b16 %v1049
  %v1632 = vunpack.c.l.b16 %v1050
  %v1633 = vunpack.c.h.b16 %v1050
  %v1634 = vunpack.c.l.b16 %v1051
  %v1635 = vunpack.c.h.b16 %v1051
  %v1636 = vunpack.c.l.b16 %v1052
  %v1637 = vunpack.c.h.b16 %v1052
  %v1638 = vunpack.c.l.b16 %v1053
  %v1639 = vunpack.c.h.b16 %v1053
  %v1640 = vunpack.c.l.b16 %v1054
  %v1641 = vunpack.c.h.b16 %v1054
  %v1642 = vunpack.c.l.b16 %v1055
  %v1643 = vunpack.c.h.b16 %v1055
  %v1644 = vunpack.c.l.b16 %v1056
  %v1645 = vunpack.c.h.b16 %v1056
  %v1646 = vunpack.c.l.b16 %v1057
  %v1647 = vunpack.c.h.b16 %v1057
  %v1648 = vunpack.c.l.b16 %v1058
  %v1649 = vunpack.c.h.b16 %v1058
  %v1650 = vunpack.c.l.b16 %v1059
  %v1651 = vunpack.c.h.b16 %v1059
  %v1652 = vunpack.c.l.b16 %v1060
  %v1653 = vunpack.c.h.b16 %v1060
  %v1654 = vunpack.c.l.b16 %v1061
  %v1655 = vunpack.c.h.b16 %v1061
  %v1656 = vunpack.c.l.b16 %v1062
  %v1657 = vunpack.c.h.b16 %v1062
  %v1658 = vunpack.c.l.b16 %v1063
  %v1659 = vunpack.c.h.b16 %v1063
  %v1660 = vunpack.c.l.b16 %v1064
  %v1661 = vunpack.c.h.b16 %v1064
  %v1662 = vunpack.c.l.b16 %v1065
  %v1663 = vunpack.c.h.b16 %v1065
  %v1664 = vunpack.c.l.b16 %v1066
  %v1665 = vunpack.c.h.b16 %v1066
  %v1666 = vunpack.c.l.b16 %v1067
  %v1667 = vunpack.c.h.b16 %v1067
  %v1668 = vunpack.c.l.b16 %v1068
  %v1669 = vunpack.c.h.b16 %v1068
  %v1670 = vunpack.c.l.b16 %v1069
  %v1671 = vunpack.c.h.b16 %v1069
  %v1672 = vunpack.c.l.b16 %v1070
  %v1673 = vunpack.c.h.b16 %v1070
  %v1674 = vunpack.c.l.b16 %v1071
  %v1675 = vunpack.c.h.b16 %v1071
  %v1676 = vunpack.c.l.b16 %v1072
  %v1677 = vunpack.c.h.b16 %v1072
  %v1678 = vunpack.c.l.b16 %v1073
  %v1679 = vunpack.c.h.b16 %v1073
  %v1680 = vunpack.c.l.b16 %v1074
  %v1681 = vunpack.c.h.b16 %v1074
  %v1682 = vunpack.c.l.b16 %v1075
  %v1683 = vunpack.c.h.b16 %v1075
  %v1684 = vpack.c.b16 %v1306, %v1300
  %v1685 = vpack.c.b16 %v1307, %v1301
  %v1686 = vpack.c.b16 %v1308, %v1302
  %v1687 = vpack.c.b16 %v1309, %v1303
  %v1688 = vpack.c.b16 %v1310, %v1304
  %v1689 = vpack.c.b16 %v1311, %v1305
  %v1690 = vpack.c.b16 %v1318, %v1312
  %v1691 = vpack.c.b16 %v1319, %v1313
  %v1692 = vpack.c.b16 %v1320, %v1314
  %v1693 = vpack.c.b16 %v1321, %v1315
  %v1694 = vpack.c.b16 %v1322, %v1316
  %v1695 = vpack.c.b16 %v1323, %v1317
  %v1696 = vpack.c.b16 %v1330, %v1324
  %v1697 = vpack.c.b16 %v1331, %v1325
  %v1698 = vpack.c.b16 %v1332, %v1326
  %v1699 = vpack.c.b16 %v1333, %v1327
  %v1700 = vpack.c.b16 %v1334, %v1328
  %v1701 = vpack.c.b16 %v1335, %v1329
  %v1702 = vpack.c.b16 %v1342, %v1336
  %v1703 = vpack.c.b16 %v1343, %v1337
  %v1704 = vpack.c.b16 %v1344, %v1338
  %v1705 = vpack.c.b16 %v1345, %v1339
  %v1706 = vpack.c.b16 %v1346, %v1340
  %v1707 = vpack.c.b16 %v1347, %v1341
  %v1708 = vpack.c.b16 %v1354, %v1348
  %v1709 = vpack.c.b16 %v1355, %v1349
  %v1710 = vpack.c.b16 %v1356, %v1350
  %v1711 = vpack.c.b16 %v1357, %v1351
  %v1712 = vpack.c.b16 %v1358, %v1352
  %v1713 = vpack.c.b16 %v1359, %v1353
  %v1714 = vpack.c.b16 %v1366, %v1360
  %v1715 = vpack.c.b16 %v1367, %v1361
  %v1716 = vpack.c.b16 %v1368, %v1362
  %v1717 = vpack.c.b16 %v1369, %v1363
  %v1718 = vpack.c.b16 %v1370, %v1364
  %v1719 = vpack.c.b16 %v1371, %v1365
  %v1720 = vpack.c.b16 %v1378, %v1372
  %v1721 = vpack.c.b16 %v1379, %v1373
  %v1722 = vpack.c.b16 %v1380, %v1374
  %v1723 = vpack.c.b16 %v1381, %v1375
  %v1724 = vpack.c.b16 %v1382, %v1376
  %v1725 = vpack.c.b16 %v1383, %v1377
  %v1726 = vpack.c.b16 %v1390, %v1384
  %v1727 = vpack.c.b16 %v1391, %v1385
  %v1728 = vpack.c.b16 %v1392, %v1386
  %v1729 = vpack.c.b16 %v1393, %v1387
  %v1730 = vpack.c.b16 %v1394, %v1388
  %v1731 = vpack.c.b16 %v1395, %v1389
  %v1732 = vpack.c.b16 %v1402, %v1396
  %v1733 = vpack.c.b16 %v1403, %v1397
  %v1734 = vpack.c.b16 %v1404, %v1398
  %v1735 = vpack.c.b16 %v1405, %v1399
  %v1736 = vpack.c.b16 %v1406, %v1400
  %v1737 = vpack.c.b16 %v1407, %v1401
  %v1738 = vpack.c.b16 %v1414, %v1408
  %v1739 = vpack.c.b16 %v1415, %v1409
  %v1740 = vpack.c.b16 %v1416, %v1410
  %v1741 = vpack.c.b16 %v1417, %v1411
  %v1742 = vpack.c.b16 %v1418, %v1412
  %v1743 = vpack.c.b16 %v1419, %v1413
  %v1744 = vpack.c.b16 %v1426, %v1420
  %v1745 = vpack.c.b16 %v1427, %v1421
  %v1746 = vpack.c.b16 %v1428, %v1422
  %v1747 = vpack.c.b16 %v1429, %v1423
  %v1748 = vpack.c.b16 %v1430, %v1424
  %v1749 = vpack.c.b16 %v1431, %v1425
  %v1750 = vpack.c.b16 %v1438, %v1432
  %v1751 = vpack.c.b16 %v1439, %v1433
  %v1752 = vpack.c.b16 %v1440, %v1434
  %v1753 = vpack.c.b16 %v1441, %v1435
  %v1754 = vpack.c.b16 %v1442, %v1436
  %v1755 = vpack.c.b16 %v1443, %v1437
  %v1756 = vpack.c.b16 %v1450, %v1444
  %v1757 = vpack.c.b16 %v1451, %v1445
  %v1758 = vpack.c.b16 %v1452, %v1446
  %v1759 = vpack.c.b16 %v1453, %v1447
  %v1760 = vpack.c.b16 %v1454, %v1448
  %v1761 = vpack.c.b16 %v1455, %v1449
  %v1762 = vpack.c.b16 %v1462, %v1456
  %v1763 = vpack.c.b16 %v1463, %v1457
  %v1764 = vpack.c.b16 %v1464, %v1458
  %v1765 = vpack.c.b16 %v1465, %v1459
  %v1766 = vpack.c.b16 %v1466, %v1460
  %v1767 = vpack.c.b16 %v1467, %v1461
  %v1768 = vpack.c.b16 %v1474, %v1468
  %v1769 = vpack.c.b16 %v1475, %v1469
  %v1770 = vpack.c.b16 %v1476, %v1470
  %v1771 = vpack.c.b16 %v1477, %v1471
  %v1772 = vpack.c.b16 %v1478, %v1472
  %v1773 = vpack.c.b16 %v1479, %v1473
  %v1774 = vpack.c.b16 %v1486, %v1480
  %v1775 = vpack.c.b16 %v1487, %v1481
  %v1776 = vpack.c.b16 %v1488, %v1482
  %v1777 = vpack.c.b16 %v1489, %v1483
  %v1778 = vpack.c.b16 %v1490, %v1484
  %v1779 = vpack.c.b16 %v1491, %v1485
  %v1780 = vpack.c.b16 %v1498, %v1492
  %v1781 = vpack.c.b16 %v1499, %v1493
  %v1782 = vpack.c.b16 %v1500, %v1494
  %v1783 = vpack.c.b16 %v1501, %v1495
  %v1784 = vpack.c.b16 %v1502, %v1496
  %v1785 = vpack.c.b16 %v1503, %v1497
  %v1786 = vpack.c.b16 %v1510, %v1504
  %v1787 = vpack.c.b16 %v1511, %v1505
  %v1788 = vpack.c.b16 %v1512, %v1506
  %v1789 = vpack.c.b16 %v1513, %v1507
  %v1790 = vpack.c.b16 %v1514, %v1508
  %v1791 = vpack.c.b16 %v1515, %v1509
  %v1792 = vpack.c.b16 %v1522, %v1516
  %v1793 = vpack.c.b16 %v1523, %v1517
  %v1794 = vpack.c.b16 %v1524, %v1518
  %v1795 = vpack.c.b16 %v1525, %v1519
  %v1796 = vpack.c.b16 %v1526, %v1520
  %v1797 = vpack.c.b16 %v1527, %v1521
  %v1798 = vpack.c.b16 %v1534, %v1528
  %v1799 = vpack.c.b16 %v1535, %v1529
  %v1800 = vpack.c.b16 %v1536, %v1530
  %v1801 = vpack.c.b16 %v1537, %v1531
  %v1802 = vpack.c.b16 %v1538, %v1532
  %v1803 = vpack.c.b16 %v1539, %v1533
  %v1804 = vpack.c.b16 %v1546, %v1540
  %v1805 = vpack.c.b16 %v1547, %v1541
  %v1806 = vpack.c.b16 %v1548, %v1542
  %v1807 = vpack.c.b16 %v1549, %v1543
  %v1808 = vpack.c.b16 %v1550, %v1544
  %v1809 = vpack.c.b16 %v1551, %v1545
  %v1810 = vpack.c.b16 %v1558, %v1552
  %v1811 = vpack.c.b16 %v1559, %v1553
  %v1812 = vpack.c.b16 %v1560, %v1554
  %v1813 = vpack.c.b16 %v1561, %v1555
  %v1814 = vpack.c.b16 %v1562, %v1556
  %v1815 = vpack.c.b16 %v1563, %v1557
  %v1816 = vpack.c.b16 %v1570, %v1564
  %v1817 = vpack.c.b16 %v1571, %v1565
  %v1818 = vpack.c.b16 %v1572, %v1566
  %v1819 = vpack.c.b16 %v1573, %v1567
  %v1820 = vpack.c.b16 %v1574, %v1568
  %v1821 = vpack.c.b16 %v1575, %v1569
  %v1822 = vpack.c.b16 %v1582, %v1576
  %v1823 = vpack.c.b16 %v1583, %v1577
  %v1824 = vpack.c.b16 %v1584, %v1578
  %v1825 = vpack.c.b16 %v1585, %v1579
  %v1826 = vpack.c.b16 %v1586, %v1580
  %v1827 = vpack.c.b16 %v1587, %v1581
  %v1828 = vpack.c.b16 %v1594, %v1588
  %v1829 = vpack.c.b16 %v1595, %v1589
  %v1830 = vpack.c.b16 %v1596, %v1590
  %v1831 = vpack.c.b16 %v1597, %v1591
  %v1832 = vpack.c.b16 %v1598, %v1592
  %v1833 = vpack.c.b16 %v1599, %v1593
  %v1834 = vpack.c.b16 %v1606, %v1600
  %v1835 = vpack.c.b16 %v1607, %v1601
  %v1836 = vpack.c.b16 %v1608, %v1602
  %v1837 = vpack.c.b16 %v1609, %v1603
  %v1838 = vpack.c.b16 %v1610, %v1604
  %v1839 = vpack.c.b16 %v1611, %v1605
  %v1840 = vpack.c.b16 %v1618, %v1612
  %v1841 = vpack.c.b16 %v1619, %v1613
  %v1842 = vpack.c.b16 %v1620, %v1614
  %v1843 = vpack.c.b16 %v1621, %v1615
  %v1844 = vpack.c.b16 %v1622, %v1616
  %v1845 = vpack.c.b16 %v1623, %v1617
  %v1846 = vpack.c.b16 %v1630, %v1624
  %v1847 = vpack.c.b16 %v1631, %v1625
  %v1848 = vpack.c.b16 %v1632, %v1626
  %v1849 = vpack.c.b16 %v1633, %v1627
  %v1850 = vpack.c.b16 %v1634, %v1628
  %v1851 = vpack.c.b16 %v1635, %v1629
  %v1852 = vpack.c.b16 %v1642, %v1636
  %v1853 = vpack.c.b16 %v1643, %v1637
  %v1854 = vpack.c.b16 %v1644, %v1638
  %v1855 = vpack.c.b16 %v1645, %v1639
  %v1856 = vpack.c.b16 %v1646, %v1640
  %v1857 = vpack.c.b16 %v1647, %v1641
  %v1858 = vpack.c.b16 %v1654, %v1648
  %v1859 = vpack.c.b16 %v1655, %v1649
  %v1860 = vpack.c.b16 %v1656, %v1650
  %v1861 = vpack.c.b16 %v1657, %v1651
  %v1862 = vpack.c.b16 %v1658, %v1652
  %v1863 = vpack.c.b16 %v1659, %v1653
  %v1864 = vpack.c.b16 %v1666, %v1660
  %v1865 = vpack.c.b16 %v1667, %v1661
  %v1866 = vpack.c.b16 %v1668, %v1662
  %v1867 = vpack.c.b16 %v1669, %v1663
  %v1868 = vpack.c.b16 %v1670, %v1664
  %v1869 = vpack.c.b16 %v1671, %v1665
  %v1870 = vpack.c.b16 %v1678, %v1672
  %v1871 = vpack.c.b16 %v1679, %v1673
  %v1872 = vpack.c.b16 %v1680, %v1674
  %v1873 = vpack.c.b16 %v1681, %v1675
  %v1874 = vpack.c.b16 %v1682, %v1676
  %v1875 = vpack.c.b16 %v1683, %v1677
  %2068 = vmatprep.subr.bf16.mxu0 %v1685
  %2069 = vmatpush1.bf16.msra.mxu0 %v1684
  %2070 = vmatprep.subr.bf16.mxu0 %v1691
  %2071 = vmatpush1.bf16.msra.mxu0 %v1690
  %2072 = vmatprep.subr.bf16.mxu0 %v1697
  %2073 = vmatpush1.bf16.msra.mxu0 %v1696
  %2074 = vmatprep.subr.bf16.mxu0 %v1703
  %2075 = vmatpush1.bf16.msra.mxu0 %v1702
  %2076 = vmatprep.subr.bf16.mxu0 %v1709
  %2077 = vmatpush1.bf16.msra.mxu0 %v1708
  %2078 = vmatprep.subr.bf16.mxu0 %v1715
  %2079 = vmatpush1.bf16.msra.mxu0 %v1714
  %2080 = vmatprep.subr.bf16.mxu0 %v1721
  %2081 = vmatpush1.bf16.msra.mxu0 %v1720
  %2082 = vmatprep.subr.bf16.mxu0 %v1727
  %2083 = vmatpush1.bf16.msra.mxu0 %v1726
  %2084 = vmatprep.subr.bf16.mxu0 %v1733
  %2085 = vmatpush1.bf16.msra.mxu0 %v1732
  %2086 = vmatprep.subr.bf16.mxu0 %v1739
  %2087 = vmatpush1.bf16.msra.mxu0 %v1738
  %2088 = vmatprep.subr.bf16.mxu0 %v1745
  %2089 = vmatpush1.bf16.msra.mxu0 %v1744
  %2090 = vmatprep.subr.bf16.mxu0 %v1751
  %2091 = vmatpush1.bf16.msra.mxu0 %v1750
  %2092 = vmatprep.subr.bf16.mxu0 %v1757
  %2093 = vmatpush1.bf16.msra.mxu0 %v1756
  %2094 = vmatprep.subr.bf16.mxu0 %v1763
  %2095 = vmatpush1.bf16.msra.mxu0 %v1762
  %2096 = vmatprep.subr.bf16.mxu0 %v1769
  %2097 = vmatpush1.bf16.msra.mxu0 %v1768
  %2098 = vmatprep.subr.bf16.mxu0 %v1775
  %2099 = vmatpush1.bf16.msra.mxu0 %v1774
  %2100 = vmatprep.mubr.bf16.mxu0 %v877
  %2101 = vmatmul.mubr.bf16.gmra.mrb[0].mxu0 %v876
  %v2102 = vpop.f32.mrb[0].mxu0
  %v2103 = vadd.f32 %v1081, %v2102
  %v2104 = vpop.f32.mrb[0].mxu0
  %v2105 = vadd.f32 %v1085, %v2104
  %v2106 = vpop.f32.mrb[0].mxu0
  %v2107 = vadd.f32 %v1081, %v2106
  %v2108 = vpop.f32.mrb[0].mxu0
  %v2109 = vadd.f32 %v1085, %v2108
  %2110 = vmatprep.mubr.bf16.mxu0 %v881
  %2111 = vmatmul.mubr.bf16.gmra.mrb[0].mxu0 %v880
  %v2112 = vpop.f32.mrb[0].mxu0
  %v2113 = vadd.f32 %v1081, %v2112
  %v2114 = vpop.f32.mrb[0].mxu0
  %v2115 = vadd.f32 %v1085, %v2114
  %v2116 = vpop.f32.mrb[0].mxu0
  %v2117 = vadd.f32 %v1081, %v2116
  %v2118 = vpop.f32.mrb[0].mxu0
  %v2119 = vadd.f32 %v1085, %v2118
  %2120 = vdwg.mxu0
  %2121 = vmatprep.subr.bf16.mxu0 %v1781
  %2122 = vmatpush1.bf16.msra.mxu0 %v1780
  %2123 = vmatprep.subr.bf16.mxu0 %v1787
  %2124 = vmatpush1.bf16.msra.mxu0 %v1786
  %2125 = vmatprep.subr.bf16.mxu0 %v1793
  %2126 = vmatpush1.bf16.msra.mxu0 %v1792
  %2127 = vmatprep.subr.bf16.mxu0 %v1799
  %2128 = vmatpush1.bf16.msra.mxu0 %v1798
  %2129 = vmatprep.subr.bf16.mxu0 %v1805
  %2130 = vmatpush1.bf16.msra.mxu0 %v1804
  %2131 = vmatprep.subr.bf16.mxu0 %v1811
  %2132 = vmatpush1.bf16.msra.mxu0 %v1810
  %2133 = vmatprep.subr.bf16.mxu0 %v1817
  %2134 = vmatpush1.bf16.msra.mxu0 %v1816
  %2135 = vmatprep.subr.bf16.mxu0 %v1823
  %2136 = vmatpush1.bf16.msra.mxu0 %v1822
  %2137 = vmatprep.subr.bf16.mxu0 %v1829
  %2138 = vmatpush1.bf16.msra.mxu0 %v1828
  %2139 = vmatprep.subr.bf16.mxu0 %v1835
  %2140 = vmatpush1.bf16.msra.mxu0 %v1834
  %2141 = vmatprep.subr.bf16.mxu0 %v1841
  %2142 = vmatpush1.bf16.msra.mxu0 %v1840
  %2143 = vmatprep.subr.bf16.mxu0 %v1847
  %2144 = vmatpush1.bf16.msra.mxu0 %v1846
  %2145 = vmatprep.subr.bf16.mxu0 %v1853
  %2146 = vmatpush1.bf16.msra.mxu0 %v1852
  %2147 = vmatprep.subr.bf16.mxu0 %v1859
  %2148 = vmatpush1.bf16.msra.mxu0 %v1858
  %2149 = vmatprep.subr.bf16.mxu0 %v1865
  %2150 = vmatpush1.bf16.msra.mxu0 %v1864
  %2151 = vmatprep.subr.bf16.mxu0 %v1871
  %2152 = vmatpush1.bf16.msra.mxu0 %v1870
  %2153 = vmatprep.mubr.bf16.mxu0 %v879
  %2154 = vmatmul.mubr.bf16.gmra.mrb[0].mxu0 %v878
  %v2155 = vpop.f32.mrb[0].mxu0
  %v2156 = vadd.f32 %v2103, %v2155
  %v2157 = vpop.f32.mrb[0].mxu0
  %v2158 = vadd.f32 %v2105, %v2157
  %v2159 = vpop.f32.mrb[0].mxu0
  %v2160 = vadd.f32 %v2107, %v2159
  %v2161 = vpop.f32.mrb[0].mxu0
  %v2162 = vadd.f32 %v2109, %v2161
  %2163 = vmatprep.mubr.bf16.mxu0 %v883
  %2164 = vmatmul.mubr.bf16.gmra.mrb[0].mxu0 %v882
  %v2165 = vpop.f32.mrb[0].mxu0
  %v2166 = vadd.f32 %v2113, %v2165
  %v2167 = vpop.f32.mrb[0].mxu0
  %v2168 = vadd.f32 %v2115, %v2167
  %v2169 = vpop.f32.mrb[0].mxu0
  %v2170 = vadd.f32 %v2117, %v2169
  %v2171 = vpop.f32.mrb[0].mxu0
  %v2172 = vadd.f32 %v2119, %v2171
  %2173 = vdwg.mxu0
  %2174 = vmatprep.subr.bf16.mxu0 %v1687
  %2175 = vmatpush1.bf16.msra.mxu0 %v1686
  %2176 = vmatprep.subr.bf16.mxu0 %v1693
  %2177 = vmatpush1.bf16.msra.mxu0 %v1692
  %2178 = vmatprep.subr.bf16.mxu0 %v1699
  %2179 = vmatpush1.bf16.msra.mxu0 %v1698
  %2180 = vmatprep.subr.bf16.mxu0 %v1705
  %2181 = vmatpush1.bf16.msra.mxu0 %v1704
  %2182 = vmatprep.subr.bf16.mxu0 %v1711
  %2183 = vmatpush1.bf16.msra.mxu0 %v1710
  %2184 = vmatprep.subr.bf16.mxu0 %v1717
  %2185 = vmatpush1.bf16.msra.mxu0 %v1716
  %2186 = vmatprep.subr.bf16.mxu0 %v1723
  %2187 = vmatpush1.bf16.msra.mxu0 %v1722
  %2188 = vmatprep.subr.bf16.mxu0 %v1729
  %2189 = vmatpush1.bf16.msra.mxu0 %v1728
  %2190 = vmatprep.subr.bf16.mxu0 %v1735
  %2191 = vmatpush1.bf16.msra.mxu0 %v1734
  %2192 = vmatprep.subr.bf16.mxu0 %v1741
  %2193 = vmatpush1.bf16.msra.mxu0 %v1740
  %2194 = vmatprep.subr.bf16.mxu0 %v1747
  %2195 = vmatpush1.bf16.msra.mxu0 %v1746
  %2196 = vmatprep.subr.bf16.mxu0 %v1753
  %2197 = vmatpush1.bf16.msra.mxu0 %v1752
  %2198 = vmatprep.subr.bf16.mxu0 %v1759
  %2199 = vmatpush1.bf16.msra.mxu0 %v1758
  %2200 = vmatprep.subr.bf16.mxu0 %v1765
  %2201 = vmatpush1.bf16.msra.mxu0 %v1764
  %2202 = vmatprep.subr.bf16.mxu0 %v1771
  %2203 = vmatpush1.bf16.msra.mxu0 %v1770
  %2204 = vmatprep.subr.bf16.mxu0 %v1777
  %2205 = vmatpush1.bf16.msra.mxu0 %v1776
  %2206 = vmatprep.mubr.bf16.mxu0 %v877
  %2207 = vmatmul.mubr.bf16.gmra.mrb[0].mxu0 %v876
  %v2208 = vpop.f32.mrb[0].mxu0
  %v2209 = vadd.f32 %v1089, %v2208
  %v2210 = vpop.f32.mrb[0].mxu0
  %v2211 = vadd.f32 %v1093, %v2210
  %v2212 = vpop.f32.mrb[0].mxu0
  %v2213 = vadd.f32 %v1089, %v2212
  %v2214 = vpop.f32.mrb[0].mxu0
  %v2215 = vadd.f32 %v1093, %v2214
  %2216 = vmatprep.mubr.bf16.mxu0 %v881
  %2217 = vmatmul.mubr.bf16.gmra.mrb[0].mxu0 %v880
  %v2218 = vpop.f32.mrb[0].mxu0
  %v2219 = vadd.f32 %v1089, %v2218
  %v2220 = vpop.f32.mrb[0].mxu0
  %v2221 = vadd.f32 %v1093, %v2220
  %v2222 = vpop.f32.mrb[0].mxu0
  %v2223 = vadd.f32 %v1089, %v2222
  %v2224 = vpop.f32.mrb[0].mxu0
  %v2225 = vadd.f32 %v1093, %v2224
  %2226 = vdwg.mxu0
  %2227 = vmatprep.subr.bf16.mxu0 %v1783
  %2228 = vmatpush1.bf16.msra.mxu0 %v1782
  %2229 = vmatprep.subr.bf16.mxu0 %v1789
  %2230 = vmatpush1.bf16.msra.mxu0 %v1788
  %2231 = vmatprep.subr.bf16.mxu0 %v1795
  %2232 = vmatpush1.bf16.msra.mxu0 %v1794
  %2233 = vmatprep.subr.bf16.mxu0 %v1801
  %2234 = vmatpush1.bf16.msra.mxu0 %v1800
  %2235 = vmatprep.subr.bf16.mxu0 %v1807
  %2236 = vmatpush1.bf16.msra.mxu0 %v1806
  %2237 = vmatprep.subr.bf16.mxu0 %v1813
  %2238 = vmatpush1.bf16.msra.mxu0 %v1812
  %2239 = vmatprep.subr.bf16.mxu0 %v1819
  %2240 = vmatpush1.bf16.msra.mxu0 %v1818
  %2241 = vmatprep.subr.bf16.mxu0 %v1825
  %2242 = vmatpush1.bf16.msra.mxu0 %v1824
  %2243 = vmatprep.subr.bf16.mxu0 %v1831
  %2244 = vmatpush1.bf16.msra.mxu0 %v1830
  %2245 = vmatprep.subr.bf16.mxu0 %v1837
  %2246 = vmatpush1.bf16.msra.mxu0 %v1836
  %2247 = vmatprep.subr.bf16.mxu0 %v1843
  %2248 = vmatpush1.bf16.msra.mxu0 %v1842
  %2249 = vmatprep.subr.bf16.mxu0 %v1849
  %2250 = vmatpush1.bf16.msra.mxu0 %v1848
  %2251 = vmatprep.subr.bf16.mxu0 %v1855
  %2252 = vmatpush1.bf16.msra.mxu0 %v1854
  %2253 = vmatprep.subr.bf16.mxu0 %v1861
  %2254 = vmatpush1.bf16.msra.mxu0 %v1860
  %2255 = vmatprep.subr.bf16.mxu0 %v1867
  %2256 = vmatpush1.bf16.msra.mxu0 %v1866
  %2257 = vmatprep.subr.bf16.mxu0 %v1873
  %2258 = vmatpush1.bf16.msra.mxu0 %v1872
  %2259 = vmatprep.mubr.bf16.mxu0 %v879
  %2260 = vmatmul.mubr.bf16.gmra.mrb[0].mxu0 %v878
  %v2261 = vpop.f32.mrb[0].mxu0
  %v2262 = vadd.f32 %v2209, %v2261
  %v2263 = vpop.f32.mrb[0].mxu0
  %v2264 = vadd.f32 %v2211, %v2263
  %v2265 = vpop.f32.mrb[0].mxu0
  %v2266 = vadd.f32 %v2213, %v2265
  %v2267 = vpop.f32.mrb[0].mxu0
  %v2268 = vadd.f32 %v2215, %v2267
  %2269 = vmatprep.mubr.bf16.mxu0 %v883
  %2270 = vmatmul.mubr.bf16.gmra.mrb[0].mxu0 %v882
  %v2271 = vpop.f32.mrb[0].mxu0
  %v2272 = vadd.f32 %v2219, %v2271
  %v2273 = vpop.f32.mrb[0].mxu0
  %v2274 = vadd.f32 %v2221, %v2273
  %v2275 = vpop.f32.mrb[0].mxu0
  %v2276 = vadd.f32 %v2223, %v2275
  %v2277 = vpop.f32.mrb[0].mxu0
  %v2278 = vadd.f32 %v2225, %v2277
  %2279 = vdwg.mxu0
  %2280 = vmatprep.subr.bf16.mxu0 %v1689
  %2281 = vmatpush1.bf16.msra.mxu0 %v1688
  %2282 = vmatprep.subr.bf16.mxu0 %v1695
  %2283 = vmatpush1.bf16.msra.mxu0 %v1694
  %2284 = vmatprep.subr.bf16.mxu0 %v1701
  %2285 = vmatpush1.bf16.msra.mxu0 %v1700
  %2286 = vmatprep.subr.bf16.mxu0 %v1707
  %2287 = vmatpush1.bf16.msra.mxu0 %v1706
  %2288 = vmatprep.subr.bf16.mxu0 %v1713
  %2289 = vmatpush1.bf16.msra.mxu0 %v1712
  %2290 = vmatprep.subr.bf16.mxu0 %v1719
  %2291 = vmatpush1.bf16.msra.mxu0 %v1718
  %2292 = vmatprep.subr.bf16.mxu0 %v1725
  %2293 = vmatpush1.bf16.msra.mxu0 %v1724
  %2294 = vmatprep.subr.bf16.mxu0 %v1731
  %2295 = vmatpush1.bf16.msra.mxu0 %v1730
  %2296 = vmatprep.subr.bf16.mxu0 %v1737
  %2297 = vmatpush1.bf16.msra.mxu0 %v1736
  %2298 = vmatprep.subr.bf16.mxu0 %v1743
  %2299 = vmatpush1.bf16.msra.mxu0 %v1742
  %2300 = vmatprep.subr.bf16.mxu0 %v1749
  %2301 = vmatpush1.bf16.msra.mxu0 %v1748
  %2302 = vmatprep.subr.bf16.mxu0 %v1755
  %2303 = vmatpush1.bf16.msra.mxu0 %v1754
  %2304 = vmatprep.subr.bf16.mxu0 %v1761
  %2305 = vmatpush1.bf16.msra.mxu0 %v1760
  %2306 = vmatprep.subr.bf16.mxu0 %v1767
  %2307 = vmatpush1.bf16.msra.mxu0 %v1766
  %2308 = vmatprep.subr.bf16.mxu0 %v1773
  %2309 = vmatpush1.bf16.msra.mxu0 %v1772
  %2310 = vmatprep.subr.bf16.mxu0 %v1779
  %2311 = vmatpush1.bf16.msra.mxu0 %v1778
  %2312 = vmatprep.mubr.bf16.mxu0 %v877
  %2313 = vmatmul.mubr.bf16.gmra.mrb[0].mxu0 %v876
  %v2314 = vpop.f32.mrb[0].mxu0
  %v2315 = vadd.f32 %v1097, %v2314
  %v2316 = vpop.f32.mrb[0].mxu0
  %v2317 = vadd.f32 %v1101, %v2316
  %v2318 = vpop.f32.mrb[0].mxu0
  %v2319 = vadd.f32 %v1097, %v2318
  %v2320 = vpop.f32.mrb[0].mxu0
  %v2321 = vadd.f32 %v1101, %v2320
  %2322 = vmatprep.mubr.bf16.mxu0 %v881
  %2323 = vmatmul.mubr.bf16.gmra.mrb[0].mxu0 %v880
  %v2324 = vpop.f32.mrb[0].mxu0
  %v2325 = vadd.f32 %v1097, %v2324
  %v2326 = vpop.f32.mrb[0].mxu0
  %v2327 = vadd.f32 %v1101, %v2326
  %v2328 = vpop.f32.mrb[0].mxu0
  %v2329 = vadd.f32 %v1097, %v2328
  %v2330 = vpop.f32.mrb[0].mxu0
  %v2331 = vadd.f32 %v1101, %v2330
  %2332 = vdwg.mxu0
  %2333 = vmatprep.subr.bf16.mxu0 %v1785
  %2334 = vmatpush1.bf16.msra.mxu0 %v1784
  %2335 = vmatprep.subr.bf16.mxu0 %v1791
  %2336 = vmatpush1.bf16.msra.mxu0 %v1790
  %2337 = vmatprep.subr.bf16.mxu0 %v1797
  %2338 = vmatpush1.bf16.msra.mxu0 %v1796
  %2339 = vmatprep.subr.bf16.mxu0 %v1803
  %2340 = vmatpush1.bf16.msra.mxu0 %v1802
  %2341 = vmatprep.subr.bf16.mxu0 %v1809
  %2342 = vmatpush1.bf16.msra.mxu0 %v1808
  %2343 = vmatprep.subr.bf16.mxu0 %v1815
  %2344 = vmatpush1.bf16.msra.mxu0 %v1814
  %2345 = vmatprep.subr.bf16.mxu0 %v1821
  %2346 = vmatpush1.bf16.msra.mxu0 %v1820
  %2347 = vmatprep.subr.bf16.mxu0 %v1827
  %2348 = vmatpush1.bf16.msra.mxu0 %v1826
  %2349 = vmatprep.subr.bf16.mxu0 %v1833
  %2350 = vmatpush1.bf16.msra.mxu0 %v1832
  %2351 = vmatprep.subr.bf16.mxu0 %v1839
  %2352 = vmatpush1.bf16.msra.mxu0 %v1838
  %2353 = vmatprep.subr.bf16.mxu0 %v1845
  %2354 = vmatpush1.bf16.msra.mxu0 %v1844
  %2355 = vmatprep.subr.bf16.mxu0 %v1851
  %2356 = vmatpush1.bf16.msra.mxu0 %v1850
  %2357 = vmatprep.subr.bf16.mxu0 %v1857
  %2358 = vmatpush1.bf16.msra.mxu0 %v1856
  %2359 = vmatprep.subr.bf16.mxu0 %v1863
  %2360 = vmatpush1.bf16.msra.mxu0 %v1862
  %2361 = vmatprep.subr.bf16.mxu0 %v1869
  %2362 = vmatpush1.bf16.msra.mxu0 %v1868
  %2363 = vmatprep.subr.bf16.mxu0 %v1875
  %2364 = vmatpush1.bf16.msra.mxu0 %v1874
  %2365 = vmatprep.mubr.bf16.mxu0 %v879
  %2366 = vmatmul.mubr.bf16.gmra.mrb[0].mxu0 %v878
  %v2367 = vpop.f32.mrb[0].mxu0
  %v2368 = vadd.f32 %v2315, %v2367
  %v2369 = vpop.f32.mrb[0].mxu0
  %v2370 = vadd.f32 %v2317, %v2369
  %v2371 = vpop.f32.mrb[0].mxu0
  %v2372 = vadd.f32 %v2319, %v2371
  %v2373 = vpop.f32.mrb[0].mxu0
  %v2374 = vadd.f32 %v2321, %v2373
  %2375 = vmatprep.mubr.bf16.mxu0 %v883
  %2376 = vmatmul.mubr.bf16.gmra.mrb[0].mxu0 %v882
  %v2377 = vpop.f32.mrb[0].mxu0
  %v2378 = vadd.f32 %v2325, %v2377
  %v2379 = vpop.f32.mrb[0].mxu0
  %v2380 = vadd.f32 %v2327, %v2379
  %v2381 = vpop.f32.mrb[0].mxu0
  %v2382 = vadd.f32 %v2329, %v2381
  %v2383 = vpop.f32.mrb[0].mxu0
  %v2384 = vadd.f32 %v2331, %v2383
  %2385 = vdwg.mxu0
  %2386 = vst [vmem:[%s9] sm:$0xff] %v2156
  %2387 = vst [vmem:[%s9 + $0x8] sm:$0xff] %v2158
  %2388 = vst [vmem:[%s9 + $0x10] sm:$0xff] %v2262
  %2389 = vst [vmem:[%s9 + $0x18] sm:$0xff] %v2264
  %2390 = vst [vmem:[%s9 + $0x20] sm:$0xff] %v2368
  %2391 = vst [vmem:[%s9 + $0x28] sm:$0xff] %v2370
  %2392 = vst [vmem:[%s9 + $0x30] sm:$0xff] %v2160
  %2393 = vst [vmem:[%s9 + $0x38] sm:$0xff] %v2162
  %2394 = vst [vmem:[%s9 + $0x40] sm:$0xff] %v2266
  %2395 = vst [vmem:[%s9 + $0x48] sm:$0xff] %v2268
  %2396 = vst [vmem:[%s9 + $0x50] sm:$0xff] %v2372
  %2397 = vst [vmem:[%s9 + $0x58] sm:$0xff] %v2374
  %2398 = vst [vmem:[%s9 + $0x60] sm:$0xff] %v2166
  %2399 = vst [vmem:[%s9 + $0x68] sm:$0xff] %v2168
  %2400 = vst [vmem:[%s9 + $0x70] sm:$0xff] %v2272
  %2401 = vst [vmem:[%s9 + $0x78] sm:$0xff] %v2274
  %2402 = vst [vmem:[%s9 + $0x80] sm:$0xff] %v2378
  %2403 = vst [vmem:[%s9 + $0x88] sm:$0xff] %v2380
  %2404 = vst [vmem:[%s9 + $0x90] sm:$0xff] %v2170
  %2405 = vst [vmem:[%s9 + $0x98] sm:$0xff] %v2172
  %2406 = vst [vmem:[%s9 + $0xa0] sm:$0xff] %v2276
  %2407 = vst [vmem:[%s9 + $0xa8] sm:$0xff] %v2278
  %2408 = vst [vmem:[%s9 + $0xb0] sm:$0xff] %v2382
  %2409 = vst [vmem:[%s9 + $0xb8] sm:$0xff] %v2384
  // Predicated region
  $region38: #{patch_producer_forward.1} parent=0 // pred_check
    _
  $region39: #{patch_producer_forward.1} parent=0 // pred_check_branch
    %2411 = sbr.rel (0) target = $region41
  $region40: #{patch_producer_forward.1} parent=0 // pred_region
    _
  $region41: #{patch_producer_forward.1} parent=0 // pred_fallthru
    _
  // Predicated region
  $region42: #{patch_producer_forward.1} parent=0 // pred_check
    _
  $region43: #{patch_producer_forward.1} parent=0 // pred_check_branch
    %2413 = sbr.rel (0) target = $region45
  $region44: #{patch_producer_forward.1} parent=0 // pred_region
    _
  $region45: #{patch_producer_forward.1} parent=0 // pred_fallthru
    _

</llo_original>
